<compile_context>
chip_gen: v7x
topology: tpu7x:2x2x1
jax: 0.10.0
libtpu: 0.0.40
codegen_flags: <defaults>
</compile_context>

<pallas_src>
import functools

import jax
import jax.numpy as jnp
from jax import lax
from jax.experimental import pallas as pl
from jax.experimental.pallas import tpu as pltpu


TB = 8      # batch rows per output tile (sublane-dense accumulator)
NBUF = 4    # ring depth over feature slots -> up to NBUF*TB gathers in flight


def _ft_kernel(idx_ref, kmax_ref, cnt_ref, bias_ref, w_hbm_ref,
               out_ref, wbuf_ref, sem_ref, *, k_cap):
    # idx_ref  : SMEM [B_pad * K] int32   (scalar prefetch; invalid entries -> 0)
    # kmax_ref : SMEM [num_tiles] int32   (scalar prefetch; max valid count per tile)
    # cnt_ref  : VMEM [TB, 1]     int32   (per-row valid-feature counts, blocked)
    # bias_ref : VMEM [1, n_out]  f32     (resident)
    # w_hbm_ref: HBM  [n_in, n_out]       (f32 or bf16; rows gathered by manual DMA)
    # out_ref  : VMEM [TB, n_out] f32     (dense output tile == accumulator)
    # wbuf_ref : VMEM [NBUF, TB, n_out]   gather ring buffer
    # sem_ref  : DMA semaphores [NBUF, TB]
    # k_cap    : static max_active_features (K)
    t = pl.program_id(0)
    tb = out_ref.shape[0]
    n_k = kmax_ref[t]                       # feature slots actually needed by this tile

    # Initialize the whole (TB, n_out) tile with the bias, once per tile.
    out_ref[...] = jnp.broadcast_to(bias_ref[...], out_ref.shape)

    def issue(k, slot):
        # Start the TB row-gathers for feature slot k into ring slot `slot`.
        base = t * tb * k_cap + k
        for r in range(tb):                 # static unroll over the 8 tile rows
            row = idx_ref[base + r * k_cap]
            pltpu.make_async_copy(
                w_hbm_ref.at[pl.ds(row, 1), :],
                wbuf_ref.at[slot, pl.ds(r, 1), :],
                sem_ref.at[slot, r],
            ).start()

    def wait_slot(slot):
        for r in range(tb):
            pltpu.make_async_copy(          # dummy descriptor: wait only needs sem+size
                w_hbm_ref.at[pl.ds(0, 1), :],
                wbuf_ref.at[slot, pl.ds(r, 1), :],
                sem_ref.at[slot, r],
            ).wait()

    # Prime the ring: start up to NBUF feature-slot gathers.
    def prime(k, carry):
        issue(k, k)
        return carry

    lax.fori_loop(0, jnp.minimum(n_k, NBUF), prime, 0)

    cnt_col = cnt_ref[...]                  # (TB, 1) int32, hoisted out of the loop

    # Main loop over feature slots: wait slot, dense masked accumulate, refill.
    def body(k, carry):
        slot = k % NBUF
        wait_slot(slot)
        maskf = (cnt_col > k).astype(jnp.float32)                 # (TB, 1)
        out_ref[...] += wbuf_ref[slot].astype(jnp.float32) * maskf

        @pl.when(k + NBUF < n_k)
        def _():
            issue(k + NBUF, slot)

        return carry

    lax.fori_loop(0, n_k, body, 0)


@jax.jit
def feature_transformer_forward(ft_ics, weight, bias):
    """Pallas implementation of FeatureTransformerSliceFunction.forward."""
    B, K = ft_ics.shape
    n_in, n_out = weight.shape

    # Reproduce the CUDA kernel's "break at first -1": anything after the first
    # -1 in a row is ignored. Valid entries therefore form a prefix of the row.
    valid = jnp.cumprod((ft_ics != -1).astype(jnp.int32), axis=1)
    counts = jnp.sum(valid, axis=1).astype(jnp.int32)              # [B]
    idx = jnp.where(valid.astype(bool), ft_ics, 0).astype(jnp.int32)

    # Pad the batch to a multiple of TB so the output tile is sublane-dense.
    B_pad = ((B + TB - 1) // TB) * TB
    pad = B_pad - B
    if pad:
        idx = jnp.pad(idx, ((0, pad), (0, 0)))
        counts = jnp.pad(counts, (0, pad))

    idx_flat = idx.reshape(-1)                                     # 1-D -> no SMEM lane padding
    tile_kmax = counts.reshape(-1, TB).max(axis=1).astype(jnp.int32)   # per-tile loop bound
    cnt2d = counts.reshape(B_pad, 1)                               # per-row mask source (VMEM)
    bias2d = bias.reshape(1, n_out).astype(jnp.float32)

    grid_spec = pltpu.PrefetchScalarGridSpec(
        num_scalar_prefetch=2,
        grid=(B_pad // TB,),
        in_specs=[
            pl.BlockSpec((TB, 1), lambda t, idx, km: (t, 0)),      # per-row counts
            pl.BlockSpec((1, n_out), lambda t, idx, km: (0, 0)),   # bias (resident)
            pl.BlockSpec(memory_space=pl.ANY),                     # weight stays in HBM
        ],
        out_specs=pl.BlockSpec((TB, n_out), lambda t, idx, km: (t, 0)),
        scratch_shapes=[
            pltpu.VMEM((NBUF, TB, n_out), weight.dtype),           # gather ring
            pltpu.SemaphoreType.DMA((NBUF, TB)),
        ],
    )

    out = pl.pallas_call(
        functools.partial(_ft_kernel, k_cap=K),
        out_shape=jax.ShapeDtypeStruct((B_pad, n_out), jnp.float32),
        grid_spec=grid_spec,
        compiler_params=pltpu.CompilerParams(
            dimension_semantics=("parallel",)),                    # megacore / v7x 2-TC split
    )(idx_flat, tile_kmax, cnt2d, bias2d, weight)
    return out[:B]


def _reference_forward(ft_ics, weight, bias):
    """Pure-JAX reference for correctness checking."""
    valid = jnp.cumprod((ft_ics != -1).astype(jnp.int32), axis=1).astype(bool)
    idx = jnp.where(valid, ft_ics, 0)
    gathered = weight[idx].astype(jnp.float32)                     # [B, K, n_out]
    summed = jnp.sum(gathered * valid[..., None].astype(jnp.float32), axis=1)
    return summed + bias[None, :].astype(jnp.float32)


def init_feature_transformer_params(key, n_in, n_out):
    """Matches FeatureTransformer.__init__: U(-s, s) with s = n_in ** -0.5."""
    s = n_in ** (-0.5)
    k_w, k_b = jax.random.split(key)
    weight = jax.random.uniform(k_w, (n_in, n_out), jnp.float32, minval=-s, maxval=s)
    bias = jax.random.uniform(k_b, (n_out,), jnp.float32, minval=-s, maxval=s)
    return weight, bias


# TODO(synk): the custom CUDA backward (scatter-add into weight_grad/bias_grad) is
# not implemented here; only the forward pass is provided.

if __name__ == "__main__":
    # Small shapes consistent with the module's forward.
    B = 4              # batch size (not a multiple of TB -> exercises padding)
    K = 8              # max_active_features (> NBUF -> exercises ring refill)
    N_IN = 64          # number of features (weight rows)
    N_OUT = 128        # output size (<= 512, lane-friendly)

    key = jax.random.PRNGKey(0)
    k_params, k_idx = jax.random.split(key)

    weight, bias = init_feature_transformer_params(k_params, N_IN, N_OUT)

    # Deterministic sparse index rows with trailing -1 padding (varying counts,
    # including an all-padding row -> output is just the bias).
    raw_idx = jax.random.randint(k_idx, (B, K), 0, N_IN, dtype=jnp.int32)
    valid_counts = jnp.array([8, 5, 3, 0], dtype=jnp.int32)
    col = jnp.arange(K, dtype=jnp.int32)[None, :]
    ft_ics = jnp.where(col < valid_counts[:, None], raw_idx, -1).astype(jnp.int32)

    out = feature_transformer_forward(ft_ics, weight, bias)
    out = jax.block_until_ready(out)

    ref = _reference_forward(ft_ics, weight, bias)
    assert out.shape == (B, N_OUT) and out.dtype == jnp.float32
    assert jnp.allclose(out, ref, atol=1e-5, rtol=1e-5), "mismatch vs reference"

    print("KERNEL_OK")
</pallas_src>

<mosaic_0001>
module attributes {stable_mosaic.version = 11 : i64} {
  func.func @_ft_kernel(%arg0: i32, %arg1: memref<64xi32, #tpu.memory_space<smem>>, %arg2: memref<1xi32, #tpu.memory_space<smem>>, %arg3: memref<8x1xi32, #tpu.memory_space<vmem>>, %arg4: memref<1x128xf32, #tpu.memory_space<vmem>>, %arg5: memref<64x128xf32, #tpu.memory_space<any>>, %arg6: memref<8x128xf32, #tpu.memory_space<vmem>>, %arg7: memref<4x8x128xf32, #tpu.memory_space<vmem>>, %arg8: memref<4x8x!tpu.dma_semaphore, #tpu.memory_space<semaphore_mem>>) attributes {dimension_semantics = [#tpu.dimension_semantics<parallel>], iteration_bounds = array<i64: 1>, scalar_prefetch = 2 : i64, scratch_operands = 2 : i64, tpu.core_type = #tpu.core_type<tc>, window_params = [{transform_indices = @transform_0, window_bounds = array<i64: 8, 1>}, {pipeline_mode = #tpu.pipeline_mode<synchronous>, transform_indices = @transform_1, window_bounds = array<i64: 1, 128>}, {}, {transform_indices = @transform_3, window_bounds = array<i64: 8, 128>}]} {
    %0 = arith.index_cast %arg0 : i32 to index
    %1 = memref.load %arg2[%0] : memref<1xi32, #tpu.memory_space<smem>>
    %c0 = arith.constant 0 : index
    %c0_0 = arith.constant 0 : index
    %2 = vector.load %arg4[%c0, %c0_0] : memref<1x128xf32, #tpu.memory_space<vmem>>, vector<1x128xf32>
    %3 = vector.shape_cast %2 : vector<1x128xf32> to vector<1x128xf32>
    %4 = vector.broadcast %3 : vector<1x128xf32> to vector<8x128xf32>
    %c0_1 = arith.constant 0 : index
    %c0_2 = arith.constant 0 : index
    %5 = vector.load %arg6[%c0_1, %c0_2] : memref<8x128xf32, #tpu.memory_space<vmem>>, vector<8x128xf32>
    tpu.vector_store %arg6[%c0_1, %c0_2], %4 {strides = array<i32>} : memref<8x128xf32, #tpu.memory_space<vmem>>, vector<8x128xf32>,
    %c4_i32 = arith.constant 4 : i32
    %6 = arith.minsi %1, %c4_i32 : i32
    %c0_i32 = arith.constant 0 : i32
    %c0_i32_3 = arith.constant 0 : i32
    %7 = arith.subi %6, %c0_i32_3 : i32
    %8 = arith.addi %c0_i32_3, %7 : i32
    %c1_i32 = arith.constant 1 : i32
    scf.for %arg9 = %c0_i32_3 to %8 step %c1_i32  : i32 {
      %c8_i32 = arith.constant 8 : i32
      %12 = arith.muli %arg0, %c8_i32 : i32
      %c8_i32_9 = arith.constant 8 : i32
      %13 = arith.muli %12, %c8_i32_9 : i32
      %14 = arith.addi %13, %arg9 : i32
      %c0_i32_10 = arith.constant 0 : i32
      %15 = arith.addi %14, %c0_i32_10 : i32
      %16 = arith.index_cast %15 : i32 to index
      %17 = memref.load %arg1[%16] : memref<64xi32, #tpu.memory_space<smem>>
      %c0_i32_11 = arith.constant 0 : i32
      %c0_i32_12 = arith.constant 0 : i32
      %18 = tpu.memref_slice %arg5[%17, %c0_i32_12] : memref<64x128xf32, #tpu.memory_space<any>> -> memref<1x128xf32, #tpu.memory_space<any>>
      %c0_i32_13 = arith.constant 0 : i32
      %c0_i32_14 = arith.constant 0 : i32
      %19 = tpu.memref_slice %arg7[%arg9, %c0_i32_13, %c0_i32_14] : memref<4x8x128xf32, #tpu.memory_space<vmem>> -> memref<1x1x128xf32, #tpu.memory_space<vmem>>
      %20 = tpu.memref_squeeze %19 : memref<1x1x128xf32, #tpu.memory_space<vmem>> -> memref<1x128xf32, #tpu.memory_space<vmem>>
      %21 = tpu.memref_slice %arg8[%arg9, %c0_i32_11] : memref<4x8x!tpu.dma_semaphore, #tpu.memory_space<semaphore_mem>> -> memref<1x1x!tpu.dma_semaphore, #tpu.memory_space<semaphore_mem>>
      %22 = tpu.memref_squeeze %21 : memref<1x1x!tpu.dma_semaphore, #tpu.memory_space<semaphore_mem>> -> memref<!tpu.dma_semaphore, #tpu.memory_space<semaphore_mem>>
      tpu.enqueue_dma source(%18 : memref<1x128xf32, #tpu.memory_space<any>>) target(%20 : memref<1x128xf32, #tpu.memory_space<vmem>>) target_semaphore(%22 : memref<!tpu.dma_semaphore, #tpu.memory_space<semaphore_mem>>)
      %c8_i32_15 = arith.constant 8 : i32
      %23 = arith.addi %14, %c8_i32_15 : i32
      %24 = arith.index_cast %23 : i32 to index
      %25 = memref.load %arg1[%24] : memref<64xi32, #tpu.memory_space<smem>>
      %c1_i32_16 = arith.constant 1 : i32
      %c0_i32_17 = arith.constant 0 : i32
      %26 = tpu.memref_slice %arg5[%25, %c0_i32_17] : memref<64x128xf32, #tpu.memory_space<any>> -> memref<1x128xf32, #tpu.memory_space<any>>
      %c1_i32_18 = arith.constant 1 : i32
      %c0_i32_19 = arith.constant 0 : i32
      %27 = tpu.memref_slice %arg7[%arg9, %c1_i32_18, %c0_i32_19] : memref<4x8x128xf32, #tpu.memory_space<vmem>> -> memref<1x1x128xf32, #tpu.memory_space<vmem>>
      %28 = tpu.memref_squeeze %27 : memref<1x1x128xf32, #tpu.memory_space<vmem>> -> memref<1x128xf32, #tpu.memory_space<vmem>>
      %29 = tpu.memref_slice %arg8[%arg9, %c1_i32_16] : memref<4x8x!tpu.dma_semaphore, #tpu.memory_space<semaphore_mem>> -> memref<1x1x!tpu.dma_semaphore, #tpu.memory_space<semaphore_mem>>
      %30 = tpu.memref_squeeze %29 : memref<1x1x!tpu.dma_semaphore, #tpu.memory_space<semaphore_mem>> -> memref<!tpu.dma_semaphore, #tpu.memory_space<semaphore_mem>>
      tpu.enqueue_dma source(%26 : memref<1x128xf32, #tpu.memory_space<any>>) target(%28 : memref<1x128xf32, #tpu.memory_space<vmem>>) target_semaphore(%30 : memref<!tpu.dma_semaphore, #tpu.memory_space<semaphore_mem>>)
      %c16_i32 = arith.constant 16 : i32
      %31 = arith.addi %14, %c16_i32 : i32
      %32 = arith.index_cast %31 : i32 to index
      %33 = memref.load %arg1[%32] : memref<64xi32, #tpu.memory_space<smem>>
      %c2_i32 = arith.constant 2 : i32
      %c0_i32_20 = arith.constant 0 : i32
      %34 = tpu.memref_slice %arg5[%33, %c0_i32_20] : memref<64x128xf32, #tpu.memory_space<any>> -> memref<1x128xf32, #tpu.memory_space<any>>
      %c2_i32_21 = arith.constant 2 : i32
      %c0_i32_22 = arith.constant 0 : i32
      %35 = tpu.memref_slice %arg7[%arg9, %c2_i32_21, %c0_i32_22] : memref<4x8x128xf32, #tpu.memory_space<vmem>> -> memref<1x1x128xf32, #tpu.memory_space<vmem>>
      %36 = tpu.memref_squeeze %35 : memref<1x1x128xf32, #tpu.memory_space<vmem>> -> memref<1x128xf32, #tpu.memory_space<vmem>>
      %37 = tpu.memref_slice %arg8[%arg9, %c2_i32] : memref<4x8x!tpu.dma_semaphore, #tpu.memory_space<semaphore_mem>> -> memref<1x1x!tpu.dma_semaphore, #tpu.memory_space<semaphore_mem>>
      %38 = tpu.memref_squeeze %37 : memref<1x1x!tpu.dma_semaphore, #tpu.memory_space<semaphore_mem>> -> memref<!tpu.dma_semaphore, #tpu.memory_space<semaphore_mem>>
      tpu.enqueue_dma source(%34 : memref<1x128xf32, #tpu.memory_space<any>>) target(%36 : memref<1x128xf32, #tpu.memory_space<vmem>>) target_semaphore(%38 : memref<!tpu.dma_semaphore, #tpu.memory_space<semaphore_mem>>)
      %c24_i32 = arith.constant 24 : i32
      %39 = arith.addi %14, %c24_i32 : i32
      %40 = arith.index_cast %39 : i32 to index
      %41 = memref.load %arg1[%40] : memref<64xi32, #tpu.memory_space<smem>>
      %c3_i32 = arith.constant 3 : i32
      %c0_i32_23 = arith.constant 0 : i32
      %42 = tpu.memref_slice %arg5[%41, %c0_i32_23] : memref<64x128xf32, #tpu.memory_space<any>> -> memref<1x128xf32, #tpu.memory_space<any>>
      %c3_i32_24 = arith.constant 3 : i32
      %c0_i32_25 = arith.constant 0 : i32
      %43 = tpu.memref_slice %arg7[%arg9, %c3_i32_24, %c0_i32_25] : memref<4x8x128xf32, #tpu.memory_space<vmem>> -> memref<1x1x128xf32, #tpu.memory_space<vmem>>
      %44 = tpu.memref_squeeze %43 : memref<1x1x128xf32, #tpu.memory_space<vmem>> -> memref<1x128xf32, #tpu.memory_space<vmem>>
      %45 = tpu.memref_slice %arg8[%arg9, %c3_i32] : memref<4x8x!tpu.dma_semaphore, #tpu.memory_space<semaphore_mem>> -> memref<1x1x!tpu.dma_semaphore, #tpu.memory_space<semaphore_mem>>
      %46 = tpu.memref_squeeze %45 : memref<1x1x!tpu.dma_semaphore, #tpu.memory_space<semaphore_mem>> -> memref<!tpu.dma_semaphore, #tpu.memory_space<semaphore_mem>>
      tpu.enqueue_dma source(%42 : memref<1x128xf32, #tpu.memory_space<any>>) target(%44 : memref<1x128xf32, #tpu.memory_space<vmem>>) target_semaphore(%46 : memref<!tpu.dma_semaphore, #tpu.memory_space<semaphore_mem>>)
      %c32_i32 = arith.constant 32 : i32
      %47 = arith.addi %14, %c32_i32 : i32
      %48 = arith.index_cast %47 : i32 to index
      %49 = memref.load %arg1[%48] : memref<64xi32, #tpu.memory_space<smem>>
      %c4_i32_26 = arith.constant 4 : i32
      %c0_i32_27 = arith.constant 0 : i32
      %50 = tpu.memref_slice %arg5[%49, %c0_i32_27] : memref<64x128xf32, #tpu.memory_space<any>> -> memref<1x128xf32, #tpu.memory_space<any>>
      %c4_i32_28 = arith.constant 4 : i32
      %c0_i32_29 = arith.constant 0 : i32
      %51 = tpu.memref_slice %arg7[%arg9, %c4_i32_28, %c0_i32_29] : memref<4x8x128xf32, #tpu.memory_space<vmem>> -> memref<1x1x128xf32, #tpu.memory_space<vmem>>
      %52 = tpu.memref_squeeze %51 : memref<1x1x128xf32, #tpu.memory_space<vmem>> -> memref<1x128xf32, #tpu.memory_space<vmem>>
      %53 = tpu.memref_slice %arg8[%arg9, %c4_i32_26] : memref<4x8x!tpu.dma_semaphore, #tpu.memory_space<semaphore_mem>> -> memref<1x1x!tpu.dma_semaphore, #tpu.memory_space<semaphore_mem>>
      %54 = tpu.memref_squeeze %53 : memref<1x1x!tpu.dma_semaphore, #tpu.memory_space<semaphore_mem>> -> memref<!tpu.dma_semaphore, #tpu.memory_space<semaphore_mem>>
      tpu.enqueue_dma source(%50 : memref<1x128xf32, #tpu.memory_space<any>>) target(%52 : memref<1x128xf32, #tpu.memory_space<vmem>>) target_semaphore(%54 : memref<!tpu.dma_semaphore, #tpu.memory_space<semaphore_mem>>)
      %c40_i32 = arith.constant 40 : i32
      %55 = arith.addi %14, %c40_i32 : i32
      %56 = arith.index_cast %55 : i32 to index
      %57 = memref.load %arg1[%56] : memref<64xi32, #tpu.memory_space<smem>>
      %c5_i32 = arith.constant 5 : i32
      %c0_i32_30 = arith.constant 0 : i32
      %58 = tpu.memref_slice %arg5[%57, %c0_i32_30] : memref<64x128xf32, #tpu.memory_space<any>> -> memref<1x128xf32, #tpu.memory_space<any>>
      %c5_i32_31 = arith.constant 5 : i32
      %c0_i32_32 = arith.constant 0 : i32
      %59 = tpu.memref_slice %arg7[%arg9, %c5_i32_31, %c0_i32_32] : memref<4x8x128xf32, #tpu.memory_space<vmem>> -> memref<1x1x128xf32, #tpu.memory_space<vmem>>
      %60 = tpu.memref_squeeze %59 : memref<1x1x128xf32, #tpu.memory_space<vmem>> -> memref<1x128xf32, #tpu.memory_space<vmem>>
      %61 = tpu.memref_slice %arg8[%arg9, %c5_i32] : memref<4x8x!tpu.dma_semaphore, #tpu.memory_space<semaphore_mem>> -> memref<1x1x!tpu.dma_semaphore, #tpu.memory_space<semaphore_mem>>
      %62 = tpu.memref_squeeze %61 : memref<1x1x!tpu.dma_semaphore, #tpu.memory_space<semaphore_mem>> -> memref<!tpu.dma_semaphore, #tpu.memory_space<semaphore_mem>>
      tpu.enqueue_dma source(%58 : memref<1x128xf32, #tpu.memory_space<any>>) target(%60 : memref<1x128xf32, #tpu.memory_space<vmem>>) target_semaphore(%62 : memref<!tpu.dma_semaphore, #tpu.memory_space<semaphore_mem>>)
      %c48_i32 = arith.constant 48 : i32
      %63 = arith.addi %14, %c48_i32 : i32
      %64 = arith.index_cast %63 : i32 to index
      %65 = memref.load %arg1[%64] : memref<64xi32, #tpu.memory_space<smem>>
      %c6_i32 = arith.constant 6 : i32
      %c0_i32_33 = arith.constant 0 : i32
      %66 = tpu.memref_slice %arg5[%65, %c0_i32_33] : memref<64x128xf32, #tpu.memory_space<any>> -> memref<1x128xf32, #tpu.memory_space<any>>
      %c6_i32_34 = arith.constant 6 : i32
      %c0_i32_35 = arith.constant 0 : i32
      %67 = tpu.memref_slice %arg7[%arg9, %c6_i32_34, %c0_i32_35] : memref<4x8x128xf32, #tpu.memory_space<vmem>> -> memref<1x1x128xf32, #tpu.memory_space<vmem>>
      %68 = tpu.memref_squeeze %67 : memref<1x1x128xf32, #tpu.memory_space<vmem>> -> memref<1x128xf32, #tpu.memory_space<vmem>>
      %69 = tpu.memref_slice %arg8[%arg9, %c6_i32] : memref<4x8x!tpu.dma_semaphore, #tpu.memory_space<semaphore_mem>> -> memref<1x1x!tpu.dma_semaphore, #tpu.memory_space<semaphore_mem>>
      %70 = tpu.memref_squeeze %69 : memref<1x1x!tpu.dma_semaphore, #tpu.memory_space<semaphore_mem>> -> memref<!tpu.dma_semaphore, #tpu.memory_space<semaphore_mem>>
      tpu.enqueue_dma source(%66 : memref<1x128xf32, #tpu.memory_space<any>>) target(%68 : memref<1x128xf32, #tpu.memory_space<vmem>>) target_semaphore(%70 : memref<!tpu.dma_semaphore, #tpu.memory_space<semaphore_mem>>)
      %c56_i32 = arith.constant 56 : i32
      %71 = arith.addi %14, %c56_i32 : i32
      %72 = arith.index_cast %71 : i32 to index
      %73 = memref.load %arg1[%72] : memref<64xi32, #tpu.memory_space<smem>>
      %c7_i32 = arith.constant 7 : i32
      %c0_i32_36 = arith.constant 0 : i32
      %74 = tpu.memref_slice %arg5[%73, %c0_i32_36] : memref<64x128xf32, #tpu.memory_space<any>> -> memref<1x128xf32, #tpu.memory_space<any>>
      %c7_i32_37 = arith.constant 7 : i32
      %c0_i32_38 = arith.constant 0 : i32
      %75 = tpu.memref_slice %arg7[%arg9, %c7_i32_37, %c0_i32_38] : memref<4x8x128xf32, #tpu.memory_space<vmem>> -> memref<1x1x128xf32, #tpu.memory_space<vmem>>
      %76 = tpu.memref_squeeze %75 : memref<1x1x128xf32, #tpu.memory_space<vmem>> -> memref<1x128xf32, #tpu.memory_space<vmem>>
      %77 = tpu.memref_slice %arg8[%arg9, %c7_i32] : memref<4x8x!tpu.dma_semaphore, #tpu.memory_space<semaphore_mem>> -> memref<1x1x!tpu.dma_semaphore, #tpu.memory_space<semaphore_mem>>
      %78 = tpu.memref_squeeze %77 : memref<1x1x!tpu.dma_semaphore, #tpu.memory_space<semaphore_mem>> -> memref<!tpu.dma_semaphore, #tpu.memory_space<semaphore_mem>>
      tpu.enqueue_dma source(%74 : memref<1x128xf32, #tpu.memory_space<any>>) target(%76 : memref<1x128xf32, #tpu.memory_space<vmem>>) target_semaphore(%78 : memref<!tpu.dma_semaphore, #tpu.memory_space<semaphore_mem>>)
    }
    %c0_4 = arith.constant 0 : index
    %c0_5 = arith.constant 0 : index
    %9 = vector.load %arg3[%c0_4, %c0_5] : memref<8x1xi32, #tpu.memory_space<vmem>>, vector<8x1xi32>
    %c0_i32_6 = arith.constant 0 : i32
    %c0_i32_7 = arith.constant 0 : i32
    %10 = arith.subi %1, %c0_i32_7 : i32
    %11 = arith.addi %c0_i32_7, %10 : i32
    %c1_i32_8 = arith.constant 1 : i32
    scf.for %arg9 = %c0_i32_7 to %11 step %c1_i32_8  : i32 {
      %c4_i32_9 = arith.constant 4 : i32
      %c0_i32_10 = arith.constant 0 : i32
      %12 = arith.cmpi eq, %c4_i32_9, %c0_i32_10 : i32
      %c1_i32_11 = arith.constant 1 : i32
      %13 = arith.select %12, %c1_i32_11, %c4_i32_9 : i32
      %14 = arith.remsi %arg9, %13 : i32
      %c0_i32_12 = arith.constant 0 : i32
      %15 = arith.cmpi ne, %14, %c0_i32_12 : i32
      %c0_i32_13 = arith.constant 0 : i32
      %16 = arith.cmpi slt, %14, %c0_i32_13 : i32
      %c0_i32_14 = arith.constant 0 : i32
      %17 = arith.cmpi slt, %13, %c0_i32_14 : i32
      %18 = arith.xori %16, %17 : i1
      %19 = arith.andi %18, %15 : i1
      %20 = arith.addi %14, %13 : i32
      %21 = arith.select %19, %20, %14 : i32
      %c0_i32_15 = arith.constant 0 : i32
      %c0_i32_16 = arith.constant 0 : i32
      %c0_i32_17 = arith.constant 0 : i32
      %22 = tpu.memref_slice %arg5[%c0_i32_16, %c0_i32_17] : memref<64x128xf32, #tpu.memory_space<any>> -> memref<1x128xf32, #tpu.memory_space<any>>
      %c0_i32_18 = arith.constant 0 : i32
      %c0_i32_19 = arith.constant 0 : i32
      %23 = tpu.memref_slice %arg7[%21, %c0_i32_18, %c0_i32_19] : memref<4x8x128xf32, #tpu.memory_space<vmem>> -> memref<1x1x128xf32, #tpu.memory_space<vmem>>
      %24 = tpu.memref_squeeze %23 : memref<1x1x128xf32, #tpu.memory_space<vmem>> -> memref<1x128xf32, #tpu.memory_space<vmem>>
      %25 = tpu.memref_slice %arg8[%21, %c0_i32_15] : memref<4x8x!tpu.dma_semaphore, #tpu.memory_space<semaphore_mem>> -> memref<1x1x!tpu.dma_semaphore, #tpu.memory_space<semaphore_mem>>
      %26 = tpu.memref_squeeze %25 : memref<1x1x!tpu.dma_semaphore, #tpu.memory_space<semaphore_mem>> -> memref<!tpu.dma_semaphore, #tpu.memory_space<semaphore_mem>>
      tpu.wait_dma2 semaphore(%26 : memref<!tpu.dma_semaphore, #tpu.memory_space<semaphore_mem>>) src(%22 : memref<1x128xf32, #tpu.memory_space<any>>) dst(%24 : memref<1x128xf32, #tpu.memory_space<vmem>>)
      %c1_i32_20 = arith.constant 1 : i32
      %c0_i32_21 = arith.constant 0 : i32
      %c0_i32_22 = arith.constant 0 : i32
      %27 = tpu.memref_slice %arg5[%c0_i32_21, %c0_i32_22] : memref<64x128xf32, #tpu.memory_space<any>> -> memref<1x128xf32, #tpu.memory_space<any>>
      %c1_i32_23 = arith.constant 1 : i32
      %c0_i32_24 = arith.constant 0 : i32
      %28 = tpu.memref_slice %arg7[%21, %c1_i32_23, %c0_i32_24] : memref<4x8x128xf32, #tpu.memory_space<vmem>> -> memref<1x1x128xf32, #tpu.memory_space<vmem>>
      %29 = tpu.memref_squeeze %28 : memref<1x1x128xf32, #tpu.memory_space<vmem>> -> memref<1x128xf32, #tpu.memory_space<vmem>>
      %30 = tpu.memref_slice %arg8[%21, %c1_i32_20] : memref<4x8x!tpu.dma_semaphore, #tpu.memory_space<semaphore_mem>> -> memref<1x1x!tpu.dma_semaphore, #tpu.memory_space<semaphore_mem>>
      %31 = tpu.memref_squeeze %30 : memref<1x1x!tpu.dma_semaphore, #tpu.memory_space<semaphore_mem>> -> memref<!tpu.dma_semaphore, #tpu.memory_space<semaphore_mem>>
      tpu.wait_dma2 semaphore(%31 : memref<!tpu.dma_semaphore, #tpu.memory_space<semaphore_mem>>) src(%27 : memref<1x128xf32, #tpu.memory_space<any>>) dst(%29 : memref<1x128xf32, #tpu.memory_space<vmem>>)
      %c2_i32 = arith.constant 2 : i32
      %c0_i32_25 = arith.constant 0 : i32
      %c0_i32_26 = arith.constant 0 : i32
      %32 = tpu.memref_slice %arg5[%c0_i32_25, %c0_i32_26] : memref<64x128xf32, #tpu.memory_space<any>> -> memref<1x128xf32, #tpu.memory_space<any>>
      %c2_i32_27 = arith.constant 2 : i32
      %c0_i32_28 = arith.constant 0 : i32
      %33 = tpu.memref_slice %arg7[%21, %c2_i32_27, %c0_i32_28] : memref<4x8x128xf32, #tpu.memory_space<vmem>> -> memref<1x1x128xf32, #tpu.memory_space<vmem>>
      %34 = tpu.memref_squeeze %33 : memref<1x1x128xf32, #tpu.memory_space<vmem>> -> memref<1x128xf32, #tpu.memory_space<vmem>>
      %35 = tpu.memref_slice %arg8[%21, %c2_i32] : memref<4x8x!tpu.dma_semaphore, #tpu.memory_space<semaphore_mem>> -> memref<1x1x!tpu.dma_semaphore, #tpu.memory_space<semaphore_mem>>
      %36 = tpu.memref_squeeze %35 : memref<1x1x!tpu.dma_semaphore, #tpu.memory_space<semaphore_mem>> -> memref<!tpu.dma_semaphore, #tpu.memory_space<semaphore_mem>>
      tpu.wait_dma2 semaphore(%36 : memref<!tpu.dma_semaphore, #tpu.memory_space<semaphore_mem>>) src(%32 : memref<1x128xf32, #tpu.memory_space<any>>) dst(%34 : memref<1x128xf32, #tpu.memory_space<vmem>>)
      %c3_i32 = arith.constant 3 : i32
      %c0_i32_29 = arith.constant 0 : i32
      %c0_i32_30 = arith.constant 0 : i32
      %37 = tpu.memref_slice %arg5[%c0_i32_29, %c0_i32_30] : memref<64x128xf32, #tpu.memory_space<any>> -> memref<1x128xf32, #tpu.memory_space<any>>
      %c3_i32_31 = arith.constant 3 : i32
      %c0_i32_32 = arith.constant 0 : i32
      %38 = tpu.memref_slice %arg7[%21, %c3_i32_31, %c0_i32_32] : memref<4x8x128xf32, #tpu.memory_space<vmem>> -> memref<1x1x128xf32, #tpu.memory_space<vmem>>
      %39 = tpu.memref_squeeze %38 : memref<1x1x128xf32, #tpu.memory_space<vmem>> -> memref<1x128xf32, #tpu.memory_space<vmem>>
      %40 = tpu.memref_slice %arg8[%21, %c3_i32] : memref<4x8x!tpu.dma_semaphore, #tpu.memory_space<semaphore_mem>> -> memref<1x1x!tpu.dma_semaphore, #tpu.memory_space<semaphore_mem>>
      %41 = tpu.memref_squeeze %40 : memref<1x1x!tpu.dma_semaphore, #tpu.memory_space<semaphore_mem>> -> memref<!tpu.dma_semaphore, #tpu.memory_space<semaphore_mem>>
      tpu.wait_dma2 semaphore(%41 : memref<!tpu.dma_semaphore, #tpu.memory_space<semaphore_mem>>) src(%37 : memref<1x128xf32, #tpu.memory_space<any>>) dst(%39 : memref<1x128xf32, #tpu.memory_space<vmem>>)
      %c4_i32_33 = arith.constant 4 : i32
      %c0_i32_34 = arith.constant 0 : i32
      %c0_i32_35 = arith.constant 0 : i32
      %42 = tpu.memref_slice %arg5[%c0_i32_34, %c0_i32_35] : memref<64x128xf32, #tpu.memory_space<any>> -> memref<1x128xf32, #tpu.memory_space<any>>
      %c4_i32_36 = arith.constant 4 : i32
      %c0_i32_37 = arith.constant 0 : i32
      %43 = tpu.memref_slice %arg7[%21, %c4_i32_36, %c0_i32_37] : memref<4x8x128xf32, #tpu.memory_space<vmem>> -> memref<1x1x128xf32, #tpu.memory_space<vmem>>
      %44 = tpu.memref_squeeze %43 : memref<1x1x128xf32, #tpu.memory_space<vmem>> -> memref<1x128xf32, #tpu.memory_space<vmem>>
      %45 = tpu.memref_slice %arg8[%21, %c4_i32_33] : memref<4x8x!tpu.dma_semaphore, #tpu.memory_space<semaphore_mem>> -> memref<1x1x!tpu.dma_semaphore, #tpu.memory_space<semaphore_mem>>
      %46 = tpu.memref_squeeze %45 : memref<1x1x!tpu.dma_semaphore, #tpu.memory_space<semaphore_mem>> -> memref<!tpu.dma_semaphore, #tpu.memory_space<semaphore_mem>>
      tpu.wait_dma2 semaphore(%46 : memref<!tpu.dma_semaphore, #tpu.memory_space<semaphore_mem>>) src(%42 : memref<1x128xf32, #tpu.memory_space<any>>) dst(%44 : memref<1x128xf32, #tpu.memory_space<vmem>>)
      %c5_i32 = arith.constant 5 : i32
      %c0_i32_38 = arith.constant 0 : i32
      %c0_i32_39 = arith.constant 0 : i32
      %47 = tpu.memref_slice %arg5[%c0_i32_38, %c0_i32_39] : memref<64x128xf32, #tpu.memory_space<any>> -> memref<1x128xf32, #tpu.memory_space<any>>
      %c5_i32_40 = arith.constant 5 : i32
      %c0_i32_41 = arith.constant 0 : i32
      %48 = tpu.memref_slice %arg7[%21, %c5_i32_40, %c0_i32_41] : memref<4x8x128xf32, #tpu.memory_space<vmem>> -> memref<1x1x128xf32, #tpu.memory_space<vmem>>
      %49 = tpu.memref_squeeze %48 : memref<1x1x128xf32, #tpu.memory_space<vmem>> -> memref<1x128xf32, #tpu.memory_space<vmem>>
      %50 = tpu.memref_slice %arg8[%21, %c5_i32] : memref<4x8x!tpu.dma_semaphore, #tpu.memory_space<semaphore_mem>> -> memref<1x1x!tpu.dma_semaphore, #tpu.memory_space<semaphore_mem>>
      %51 = tpu.memref_squeeze %50 : memref<1x1x!tpu.dma_semaphore, #tpu.memory_space<semaphore_mem>> -> memref<!tpu.dma_semaphore, #tpu.memory_space<semaphore_mem>>
      tpu.wait_dma2 semaphore(%51 : memref<!tpu.dma_semaphore, #tpu.memory_space<semaphore_mem>>) src(%47 : memref<1x128xf32, #tpu.memory_space<any>>) dst(%49 : memref<1x128xf32, #tpu.memory_space<vmem>>)
      %c6_i32 = arith.constant 6 : i32
      %c0_i32_42 = arith.constant 0 : i32
      %c0_i32_43 = arith.constant 0 : i32
      %52 = tpu.memref_slice %arg5[%c0_i32_42, %c0_i32_43] : memref<64x128xf32, #tpu.memory_space<any>> -> memref<1x128xf32, #tpu.memory_space<any>>
      %c6_i32_44 = arith.constant 6 : i32
      %c0_i32_45 = arith.constant 0 : i32
      %53 = tpu.memref_slice %arg7[%21, %c6_i32_44, %c0_i32_45] : memref<4x8x128xf32, #tpu.memory_space<vmem>> -> memref<1x1x128xf32, #tpu.memory_space<vmem>>
      %54 = tpu.memref_squeeze %53 : memref<1x1x128xf32, #tpu.memory_space<vmem>> -> memref<1x128xf32, #tpu.memory_space<vmem>>
      %55 = tpu.memref_slice %arg8[%21, %c6_i32] : memref<4x8x!tpu.dma_semaphore, #tpu.memory_space<semaphore_mem>> -> memref<1x1x!tpu.dma_semaphore, #tpu.memory_space<semaphore_mem>>
      %56 = tpu.memref_squeeze %55 : memref<1x1x!tpu.dma_semaphore, #tpu.memory_space<semaphore_mem>> -> memref<!tpu.dma_semaphore, #tpu.memory_space<semaphore_mem>>
      tpu.wait_dma2 semaphore(%56 : memref<!tpu.dma_semaphore, #tpu.memory_space<semaphore_mem>>) src(%52 : memref<1x128xf32, #tpu.memory_space<any>>) dst(%54 : memref<1x128xf32, #tpu.memory_space<vmem>>)
      %c7_i32 = arith.constant 7 : i32
      %c0_i32_46 = arith.constant 0 : i32
      %c0_i32_47 = arith.constant 0 : i32
      %57 = tpu.memref_slice %arg5[%c0_i32_46, %c0_i32_47] : memref<64x128xf32, #tpu.memory_space<any>> -> memref<1x128xf32, #tpu.memory_space<any>>
      %c7_i32_48 = arith.constant 7 : i32
      %c0_i32_49 = arith.constant 0 : i32
      %58 = tpu.memref_slice %arg7[%21, %c7_i32_48, %c0_i32_49] : memref<4x8x128xf32, #tpu.memory_space<vmem>> -> memref<1x1x128xf32, #tpu.memory_space<vmem>>
      %59 = tpu.memref_squeeze %58 : memref<1x1x128xf32, #tpu.memory_space<vmem>> -> memref<1x128xf32, #tpu.memory_space<vmem>>
      %60 = tpu.memref_slice %arg8[%21, %c7_i32] : memref<4x8x!tpu.dma_semaphore, #tpu.memory_space<semaphore_mem>> -> memref<1x1x!tpu.dma_semaphore, #tpu.memory_space<semaphore_mem>>
      %61 = tpu.memref_squeeze %60 : memref<1x1x!tpu.dma_semaphore, #tpu.memory_space<semaphore_mem>> -> memref<!tpu.dma_semaphore, #tpu.memory_space<semaphore_mem>>
      tpu.wait_dma2 semaphore(%61 : memref<!tpu.dma_semaphore, #tpu.memory_space<semaphore_mem>>) src(%57 : memref<1x128xf32, #tpu.memory_space<any>>) dst(%59 : memref<1x128xf32, #tpu.memory_space<vmem>>)
      %62 = vector.broadcast %arg9 : i32 to vector<8x1xi32>
      %63 = arith.cmpi sgt, %9, %62 : vector<8x1xi32>
      %64 = arith.extui %63 : vector<8x1xi1> to vector<8x1xi32>
      %65 = arith.sitofp %64 : vector<8x1xi32> to vector<8x1xf32>
      %c0_50 = arith.constant 0 : index
      %c0_51 = arith.constant 0 : index
      %66 = vector.load %arg6[%c0_50, %c0_51] : memref<8x128xf32, #tpu.memory_space<vmem>>, vector<8x128xf32>
      %67 = arith.index_cast %21 : i32 to index
      %c0_52 = arith.constant 0 : index
      %c0_53 = arith.constant 0 : index
      %68 = vector.load %arg7[%67, %c0_52, %c0_53] : memref<4x8x128xf32, #tpu.memory_space<vmem>>, vector<1x8x128xf32>
      %69 = vector.shape_cast %68 : vector<1x8x128xf32> to vector<8x128xf32>
      %70 = vector.broadcast %65 : vector<8x1xf32> to vector<8x128xf32>
      %71 = arith.mulf %69, %70 : vector<8x128xf32>
      %72 = arith.addf %66, %71 : vector<8x128xf32>
      %c0_54 = arith.constant 0 : index
      %c0_55 = arith.constant 0 : index
      %73 = vector.load %arg6[%c0_54, %c0_55] : memref<8x128xf32, #tpu.memory_space<vmem>>, vector<8x128xf32>
      tpu.vector_store %arg6[%c0_54, %c0_55], %72 {strides = array<i32>} : memref<8x128xf32, #tpu.memory_space<vmem>>, vector<8x128xf32>,
      %c4_i32_56 = arith.constant 4 : i32
      %74 = arith.addi %arg9, %c4_i32_56 : i32
      %75 = arith.cmpi slt, %74, %1 : i32
      %76 = arith.extui %75 : i1 to i32
      %c0_i32_57 = arith.constant 0 : i32
      %77 = arith.cmpi ne, %76, %c0_i32_57 : i32
      scf.if %77 {
        %c4_i32_58 = arith.constant 4 : i32
        %78 = arith.addi %arg9, %c4_i32_58 : i32
        %c8_i32 = arith.constant 8 : i32
        %79 = arith.muli %arg0, %c8_i32 : i32
        %c8_i32_59 = arith.constant 8 : i32
        %80 = arith.muli %79, %c8_i32_59 : i32
        %81 = arith.addi %80, %78 : i32
        %c0_i32_60 = arith.constant 0 : i32
        %82 = arith.addi %81, %c0_i32_60 : i32
        %83 = arith.index_cast %82 : i32 to index
        %84 = memref.load %arg1[%83] : memref<64xi32, #tpu.memory_space<smem>>
        %c0_i32_61 = arith.constant 0 : i32
        %c0_i32_62 = arith.constant 0 : i32
        %85 = tpu.memref_slice %arg5[%84, %c0_i32_62] : memref<64x128xf32, #tpu.memory_space<any>> -> memref<1x128xf32, #tpu.memory_space<any>>
        %c0_i32_63 = arith.constant 0 : i32
        %c0_i32_64 = arith.constant 0 : i32
        %86 = tpu.memref_slice %arg7[%21, %c0_i32_63, %c0_i32_64] : memref<4x8x128xf32, #tpu.memory_space<vmem>> -> memref<1x1x128xf32, #tpu.memory_space<vmem>>
        %87 = tpu.memref_squeeze %86 : memref<1x1x128xf32, #tpu.memory_space<vmem>> -> memref<1x128xf32, #tpu.memory_space<vmem>>
        %88 = tpu.memref_slice %arg8[%21, %c0_i32_61] : memref<4x8x!tpu.dma_semaphore, #tpu.memory_space<semaphore_mem>> -> memref<1x1x!tpu.dma_semaphore, #tpu.memory_space<semaphore_mem>>
        %89 = tpu.memref_squeeze %88 : memref<1x1x!tpu.dma_semaphore, #tpu.memory_space<semaphore_mem>> -> memref<!tpu.dma_semaphore, #tpu.memory_space<semaphore_mem>>
        tpu.enqueue_dma source(%85 : memref<1x128xf32, #tpu.memory_space<any>>) target(%87 : memref<1x128xf32, #tpu.memory_space<vmem>>) target_semaphore(%89 : memref<!tpu.dma_semaphore, #tpu.memory_space<semaphore_mem>>)
        %c8_i32_65 = arith.constant 8 : i32
        %90 = arith.addi %81, %c8_i32_65 : i32
        %91 = arith.index_cast %90 : i32 to index
        %92 = memref.load %arg1[%91] : memref<64xi32, #tpu.memory_space<smem>>
        %c1_i32_66 = arith.constant 1 : i32
        %c0_i32_67 = arith.constant 0 : i32
        %93 = tpu.memref_slice %arg5[%92, %c0_i32_67] : memref<64x128xf32, #tpu.memory_space<any>> -> memref<1x128xf32, #tpu.memory_space<any>>
        %c1_i32_68 = arith.constant 1 : i32
        %c0_i32_69 = arith.constant 0 : i32
        %94 = tpu.memref_slice %arg7[%21, %c1_i32_68, %c0_i32_69] : memref<4x8x128xf32, #tpu.memory_space<vmem>> -> memref<1x1x128xf32, #tpu.memory_space<vmem>>
        %95 = tpu.memref_squeeze %94 : memref<1x1x128xf32, #tpu.memory_space<vmem>> -> memref<1x128xf32, #tpu.memory_space<vmem>>
        %96 = tpu.memref_slice %arg8[%21, %c1_i32_66] : memref<4x8x!tpu.dma_semaphore, #tpu.memory_space<semaphore_mem>> -> memref<1x1x!tpu.dma_semaphore, #tpu.memory_space<semaphore_mem>>
        %97 = tpu.memref_squeeze %96 : memref<1x1x!tpu.dma_semaphore, #tpu.memory_space<semaphore_mem>> -> memref<!tpu.dma_semaphore, #tpu.memory_space<semaphore_mem>>
        tpu.enqueue_dma source(%93 : memref<1x128xf32, #tpu.memory_space<any>>) target(%95 : memref<1x128xf32, #tpu.memory_space<vmem>>) target_semaphore(%97 : memref<!tpu.dma_semaphore, #tpu.memory_space<semaphore_mem>>)
        %c16_i32 = arith.constant 16 : i32
        %98 = arith.addi %81, %c16_i32 : i32
        %99 = arith.index_cast %98 : i32 to index
        %100 = memref.load %arg1[%99] : memref<64xi32, #tpu.memory_space<smem>>
        %c2_i32_70 = arith.constant 2 : i32
        %c0_i32_71 = arith.constant 0 : i32
        %101 = tpu.memref_slice %arg5[%100, %c0_i32_71] : memref<64x128xf32, #tpu.memory_space<any>> -> memref<1x128xf32, #tpu.memory_space<any>>
        %c2_i32_72 = arith.constant 2 : i32
        %c0_i32_73 = arith.constant 0 : i32
        %102 = tpu.memref_slice %arg7[%21, %c2_i32_72, %c0_i32_73] : memref<4x8x128xf32, #tpu.memory_space<vmem>> -> memref<1x1x128xf32, #tpu.memory_space<vmem>>
        %103 = tpu.memref_squeeze %102 : memref<1x1x128xf32, #tpu.memory_space<vmem>> -> memref<1x128xf32, #tpu.memory_space<vmem>>
        %104 = tpu.memref_slice %arg8[%21, %c2_i32_70] : memref<4x8x!tpu.dma_semaphore, #tpu.memory_space<semaphore_mem>> -> memref<1x1x!tpu.dma_semaphore, #tpu.memory_space<semaphore_mem>>
        %105 = tpu.memref_squeeze %104 : memref<1x1x!tpu.dma_semaphore, #tpu.memory_space<semaphore_mem>> -> memref<!tpu.dma_semaphore, #tpu.memory_space<semaphore_mem>>
        tpu.enqueue_dma source(%101 : memref<1x128xf32, #tpu.memory_space<any>>) target(%103 : memref<1x128xf32, #tpu.memory_space<vmem>>) target_semaphore(%105 : memref<!tpu.dma_semaphore, #tpu.memory_space<semaphore_mem>>)
        %c24_i32 = arith.constant 24 : i32
        %106 = arith.addi %81, %c24_i32 : i32
        %107 = arith.index_cast %106 : i32 to index
        %108 = memref.load %arg1[%107] : memref<64xi32, #tpu.memory_space<smem>>
        %c3_i32_74 = arith.constant 3 : i32
        %c0_i32_75 = arith.constant 0 : i32
        %109 = tpu.memref_slice %arg5[%108, %c0_i32_75] : memref<64x128xf32, #tpu.memory_space<any>> -> memref<1x128xf32, #tpu.memory_space<any>>
        %c3_i32_76 = arith.constant 3 : i32
        %c0_i32_77 = arith.constant 0 : i32
        %110 = tpu.memref_slice %arg7[%21, %c3_i32_76, %c0_i32_77] : memref<4x8x128xf32, #tpu.memory_space<vmem>> -> memref<1x1x128xf32, #tpu.memory_space<vmem>>
        %111 = tpu.memref_squeeze %110 : memref<1x1x128xf32, #tpu.memory_space<vmem>> -> memref<1x128xf32, #tpu.memory_space<vmem>>
        %112 = tpu.memref_slice %arg8[%21, %c3_i32_74] : memref<4x8x!tpu.dma_semaphore, #tpu.memory_space<semaphore_mem>> -> memref<1x1x!tpu.dma_semaphore, #tpu.memory_space<semaphore_mem>>
        %113 = tpu.memref_squeeze %112 : memref<1x1x!tpu.dma_semaphore, #tpu.memory_space<semaphore_mem>> -> memref<!tpu.dma_semaphore, #tpu.memory_space<semaphore_mem>>
        tpu.enqueue_dma source(%109 : memref<1x128xf32, #tpu.memory_space<any>>) target(%111 : memref<1x128xf32, #tpu.memory_space<vmem>>) target_semaphore(%113 : memref<!tpu.dma_semaphore, #tpu.memory_space<semaphore_mem>>)
        %c32_i32 = arith.constant 32 : i32
        %114 = arith.addi %81, %c32_i32 : i32
        %115 = arith.index_cast %114 : i32 to index
        %116 = memref.load %arg1[%115] : memref<64xi32, #tpu.memory_space<smem>>
        %c4_i32_78 = arith.constant 4 : i32
        %c0_i32_79 = arith.constant 0 : i32
        %117 = tpu.memref_slice %arg5[%116, %c0_i32_79] : memref<64x128xf32, #tpu.memory_space<any>> -> memref<1x128xf32, #tpu.memory_space<any>>
        %c4_i32_80 = arith.constant 4 : i32
        %c0_i32_81 = arith.constant 0 : i32
        %118 = tpu.memref_slice %arg7[%21, %c4_i32_80, %c0_i32_81] : memref<4x8x128xf32, #tpu.memory_space<vmem>> -> memref<1x1x128xf32, #tpu.memory_space<vmem>>
        %119 = tpu.memref_squeeze %118 : memref<1x1x128xf32, #tpu.memory_space<vmem>> -> memref<1x128xf32, #tpu.memory_space<vmem>>
        %120 = tpu.memref_slice %arg8[%21, %c4_i32_78] : memref<4x8x!tpu.dma_semaphore, #tpu.memory_space<semaphore_mem>> -> memref<1x1x!tpu.dma_semaphore, #tpu.memory_space<semaphore_mem>>
        %121 = tpu.memref_squeeze %120 : memref<1x1x!tpu.dma_semaphore, #tpu.memory_space<semaphore_mem>> -> memref<!tpu.dma_semaphore, #tpu.memory_space<semaphore_mem>>
        tpu.enqueue_dma source(%117 : memref<1x128xf32, #tpu.memory_space<any>>) target(%119 : memref<1x128xf32, #tpu.memory_space<vmem>>) target_semaphore(%121 : memref<!tpu.dma_semaphore, #tpu.memory_space<semaphore_mem>>)
        %c40_i32 = arith.constant 40 : i32
        %122 = arith.addi %81, %c40_i32 : i32
        %123 = arith.index_cast %122 : i32 to index
        %124 = memref.load %arg1[%123] : memref<64xi32, #tpu.memory_space<smem>>
        %c5_i32_82 = arith.constant 5 : i32
        %c0_i32_83 = arith.constant 0 : i32
        %125 = tpu.memref_slice %arg5[%124, %c0_i32_83] : memref<64x128xf32, #tpu.memory_space<any>> -> memref<1x128xf32, #tpu.memory_space<any>>
        %c5_i32_84 = arith.constant 5 : i32
        %c0_i32_85 = arith.constant 0 : i32
        %126 = tpu.memref_slice %arg7[%21, %c5_i32_84, %c0_i32_85] : memref<4x8x128xf32, #tpu.memory_space<vmem>> -> memref<1x1x128xf32, #tpu.memory_space<vmem>>
        %127 = tpu.memref_squeeze %126 : memref<1x1x128xf32, #tpu.memory_space<vmem>> -> memref<1x128xf32, #tpu.memory_space<vmem>>
        %128 = tpu.memref_slice %arg8[%21, %c5_i32_82] : memref<4x8x!tpu.dma_semaphore, #tpu.memory_space<semaphore_mem>> -> memref<1x1x!tpu.dma_semaphore, #tpu.memory_space<semaphore_mem>>
        %129 = tpu.memref_squeeze %128 : memref<1x1x!tpu.dma_semaphore, #tpu.memory_space<semaphore_mem>> -> memref<!tpu.dma_semaphore, #tpu.memory_space<semaphore_mem>>
        tpu.enqueue_dma source(%125 : memref<1x128xf32, #tpu.memory_space<any>>) target(%127 : memref<1x128xf32, #tpu.memory_space<vmem>>) target_semaphore(%129 : memref<!tpu.dma_semaphore, #tpu.memory_space<semaphore_mem>>)
        %c48_i32 = arith.constant 48 : i32
        %130 = arith.addi %81, %c48_i32 : i32
        %131 = arith.index_cast %130 : i32 to index
        %132 = memref.load %arg1[%131] : memref<64xi32, #tpu.memory_space<smem>>
        %c6_i32_86 = arith.constant 6 : i32
        %c0_i32_87 = arith.constant 0 : i32
        %133 = tpu.memref_slice %arg5[%132, %c0_i32_87] : memref<64x128xf32, #tpu.memory_space<any>> -> memref<1x128xf32, #tpu.memory_space<any>>
        %c6_i32_88 = arith.constant 6 : i32
        %c0_i32_89 = arith.constant 0 : i32
        %134 = tpu.memref_slice %arg7[%21, %c6_i32_88, %c0_i32_89] : memref<4x8x128xf32, #tpu.memory_space<vmem>> -> memref<1x1x128xf32, #tpu.memory_space<vmem>>
        %135 = tpu.memref_squeeze %134 : memref<1x1x128xf32, #tpu.memory_space<vmem>> -> memref<1x128xf32, #tpu.memory_space<vmem>>
        %136 = tpu.memref_slice %arg8[%21, %c6_i32_86] : memref<4x8x!tpu.dma_semaphore, #tpu.memory_space<semaphore_mem>> -> memref<1x1x!tpu.dma_semaphore, #tpu.memory_space<semaphore_mem>>
        %137 = tpu.memref_squeeze %136 : memref<1x1x!tpu.dma_semaphore, #tpu.memory_space<semaphore_mem>> -> memref<!tpu.dma_semaphore, #tpu.memory_space<semaphore_mem>>
        tpu.enqueue_dma source(%133 : memref<1x128xf32, #tpu.memory_space<any>>) target(%135 : memref<1x128xf32, #tpu.memory_space<vmem>>) target_semaphore(%137 : memref<!tpu.dma_semaphore, #tpu.memory_space<semaphore_mem>>)
        %c56_i32 = arith.constant 56 : i32
        %138 = arith.addi %81, %c56_i32 : i32
        %139 = arith.index_cast %138 : i32 to index
        %140 = memref.load %arg1[%139] : memref<64xi32, #tpu.memory_space<smem>>
        %c7_i32_90 = arith.constant 7 : i32
        %c0_i32_91 = arith.constant 0 : i32
        %141 = tpu.memref_slice %arg5[%140, %c0_i32_91] : memref<64x128xf32, #tpu.memory_space<any>> -> memref<1x128xf32, #tpu.memory_space<any>>
        %c7_i32_92 = arith.constant 7 : i32
        %c0_i32_93 = arith.constant 0 : i32
        %142 = tpu.memref_slice %arg7[%21, %c7_i32_92, %c0_i32_93] : memref<4x8x128xf32, #tpu.memory_space<vmem>> -> memref<1x1x128xf32, #tpu.memory_space<vmem>>
        %143 = tpu.memref_squeeze %142 : memref<1x1x128xf32, #tpu.memory_space<vmem>> -> memref<1x128xf32, #tpu.memory_space<vmem>>
        %144 = tpu.memref_slice %arg8[%21, %c7_i32_90] : memref<4x8x!tpu.dma_semaphore, #tpu.memory_space<semaphore_mem>> -> memref<1x1x!tpu.dma_semaphore, #tpu.memory_space<semaphore_mem>>
        %145 = tpu.memref_squeeze %144 : memref<1x1x!tpu.dma_semaphore, #tpu.memory_space<semaphore_mem>> -> memref<!tpu.dma_semaphore, #tpu.memory_space<semaphore_mem>>
        tpu.enqueue_dma source(%141 : memref<1x128xf32, #tpu.memory_space<any>>) target(%143 : memref<1x128xf32, #tpu.memory_space<vmem>>) target_semaphore(%145 : memref<!tpu.dma_semaphore, #tpu.memory_space<semaphore_mem>>)
      } else {
      }
    }
    return
  }
  func.func @transform_0(%arg0: i32, %arg1: memref<64xi32, #tpu.memory_space<smem>>, %arg2: memref<1xi32, #tpu.memory_space<smem>>) -> (i32, i32) {
    %c0_i32 = arith.constant 0 : i32
    %c0_i32_0 = arith.constant 0 : i32
    return %arg0, %c0_i32 : i32, i32
  }
  func.func @transform_1(%arg0: i32, %arg1: memref<64xi32, #tpu.memory_space<smem>>, %arg2: memref<1xi32, #tpu.memory_space<smem>>) -> (i32, i32) {
    %c0_i32 = arith.constant 0 : i32
    %c0_i32_0 = arith.constant 0 : i32
    %c0_i32_1 = arith.constant 0 : i32
    return %c0_i32, %c0_i32_0 : i32, i32
  }
  func.func @transform_3(%arg0: i32, %arg1: memref<64xi32, #tpu.memory_space<smem>>, %arg2: memref<1xi32, #tpu.memory_space<smem>>) -> (i32, i32) {
    %c0_i32 = arith.constant 0 : i32
    %c0_i32_0 = arith.constant 0 : i32
    return %arg0, %c0_i32 : i32, i32
  }
}

</mosaic_0001>

<llo_original>
// kernel: feature_transformer_forward.1
$region0: #{feature_transformer_forward.1}
  #allocation0 [shape = 'u32[]', space=smem, size = 0x4, offset = 0x4, fixed_abs, tag = 'smem constant byte address 0x4 - core index']
  #allocation1 [shape = 'u32[144,128]{1,0:T(1,128)}', space=vmem, size = 0x12000, scoped, tag = 'internal scratch']
  #allocation2 [shape = 'f32[4,8,128]{2,1,0:T(8,128)}', space=vmem, size = 0x4000, scoped, tag = 'scratch operand']
  #allocation3 [shape = 's32[32]{0}', space=sflag, size = 0x80, scoped, tag = 'scratch operand']
  #allocation4 [shape = 's32[1]{0}', space=sflag, size = 0x4, scoped, tag = 'scoped memory for feature_transformer_forward.1']
  #allocation5 [shape = 'u8[512]{0}', space=smem, size = 0x200, scoped, tag = 'prefetched SMEM operand 0']
  #allocation6 [shape = 's32[1]{0:T(128)S(6)}', space=smem, size = 0x200, scoped, tag = 'prefetched SMEM operand 1']
  #allocation7 [shape = 's32[]', space=sflag, size = 0x4, offset = 0, fixed_abs, tag = 'sflag constant byte address 0x0 - dummy sync flag']
  #allocation8 [shape = 's32[]', space=sflag, size = 0x4, offset = 0, fixed_abs, tag = 'sflag constant byte address 0x0 - dummy sync flag']
  #allocation9 [shape = 's32[]', space=sflag, size = 0x4, offset = 0, fixed_abs, tag = 'sflag constant byte address 0x0 - dummy sync flag']
  #allocation10 [shape = 's32[]', space=sflag, size = 0x4, offset = 0, fixed_abs, tag = 'sflag constant byte address 0x0 - dummy sync flag']
  #allocation11 [shape = 's32[]', space=sflag, size = 0x4, offset = 0, fixed_abs, tag = 'sflag constant byte address 0x0 - dummy sync flag']
  #allocation12 [shape = 's32[]', space=sflag, size = 0x4, offset = 0, fixed_abs, tag = 'sflag constant byte address 0x0 - dummy sync flag']
  #allocation13 [shape = 's32[]', space=sflag, size = 0x4, offset = 0, fixed_abs, tag = 'sflag constant byte address 0x0 - dummy sync flag']
  #allocation14 [shape = 's32[]', space=sflag, size = 0x4, offset = 0, fixed_abs, tag = 'sflag constant byte address 0x0 - dummy sync flag']
  #allocation15 [shape = 's32[]', space=sflag, size = 0x4, offset = 0, fixed_abs, tag = 'sflag constant byte address 0x0 - dummy sync flag']
  #allocation16 [shape = 's32[]', space=sflag, size = 0x4, offset = 0, fixed_abs, tag = 'sflag constant byte address 0x0 - dummy sync flag']
  #allocation17 [shape = 's32[]', space=sflag, size = 0x4, offset = 0, fixed_abs, tag = 'sflag constant byte address 0x0 - dummy sync flag']
  #allocation18 [shape = 's32[]', space=sflag, size = 0x4, offset = 0, fixed_abs, tag = 'sflag constant byte address 0x0 - dummy sync flag']
  #allocation19 [shape = 's32[]', space=sflag, size = 0x4, offset = 0, fixed_abs, tag = 'sflag constant byte address 0x0 - dummy sync flag']
  #allocation20 [shape = 's32[]', space=sflag, size = 0x4, offset = 0, fixed_abs, tag = 'sflag constant byte address 0x0 - dummy sync flag']
  #allocation21 [shape = 's32[]', space=sflag, size = 0x4, offset = 0, fixed_abs, tag = 'sflag constant byte address 0x0 - dummy sync flag']
  #allocation22 [shape = 's32[]', space=sflag, size = 0x4, offset = 0, fixed_abs, tag = 'sflag constant byte address 0x0 - dummy sync flag']
  %s0 = inlined_call_operand.vmem [shape: s32[64], index: 0, kind: input, shape index: {}]
  %s1 = inlined_call_operand.<no memory space> [shape: s32[1], index: 1, kind: input, shape index: {}]
  %s2 = inlined_call_operand.vmem [shape: s32[8,1], index: 2, kind: input, shape index: {}]
  %s3 = inlined_call_operand.vmem [shape: f32[1,128], index: 3, kind: input, shape index: {}]
  %s4 = inlined_call_operand.vmem [shape: f32[64,128], index: 4, kind: input, shape index: {}]
  %s5 = inlined_call_operand.vmem [shape: f32[8,128], index: 5, kind: output, shape index: {}]
  %s6 = sld [smem:[#allocation0]]
  $region516: #{feature_transformer_forward.1} parent=0
    _
  %s8 = ssub.s32 1, %s6
  %s9 = scalar_select 0, %s8, %s6
  %s10 = sshll.u32 %s0, 4
  %s11 = int_to_ptr.vmem [resolvable:$true] %s10
  %13 = dma.vmem_to_smem %s11, 16, [#allocation5], [#allocation4]
  %14 = sst [smem:[#allocation6]] %s1
  %15 = dma.done [#allocation4], 16
  %16 = sfence
  // Predicated region
  $region2: #{feature_transformer_forward.1} parent=0 // pred_check
    _
  $region3: #{feature_transformer_forward.1} parent=0 // pred_check_branch
    %18 = sbr.rel (0) target = $region5
  $region4: #{feature_transformer_forward.1} parent=0 // pred_region
    _
  $region5: #{feature_transformer_forward.1} parent=0 // pred_fallthru
    _
  // Predicated region
  $region6: #{feature_transformer_forward.1} parent=0 // pred_check
    _
  $region7: #{feature_transformer_forward.1} parent=0 // pred_check_branch
    %20 = sbr.rel (0) target = $region9
  $region8: #{feature_transformer_forward.1} parent=0 // pred_region
    _
  $region9: #{feature_transformer_forward.1} parent=0 // pred_fallthru
    _
  %s21 = sld [smem:[#allocation6]]
  %v22 = vld [vmem:[%s3] sm:$0x1]
  %v24 = vlaneseq
  %v25 = vshrl.u32 %v24, 7
  %v26 = vsub.s32 0, %v25
  %v27 = vrot.slane %v22, %v26
  %29 = vst [vmem:[%s5] sm:$0xff] %v27
  %p30 = scmp.lt.s32.totalorder %s21, 4
  %s31 = scalar_select %p30, %s21, 4
  // While loop
  $region10: #{feature_transformer_forward.1} parent=0 // loop_pre_header
    _
  $region11: #{feature_transformer_forward.1} parent=0 // loop_header
    %s33 = sphi 0, %s35
    %p34 = scmp.ge.s32.totalorder %s33, %s31
  $region12: #{feature_transformer_forward.1} parent=0 // loop_header_branch
    %37 = sbr.rel (%p34) target = $region16
  $region13: #{feature_transformer_forward.1} parent=0 // loop_body
    %s38 = smul.u32 0, 64
    %s39 = sadd.s32 %s38, %s33
    %s40 = sld [smem:[#allocation5 + %s39]]
    %s41 = scalar_lea.vmem %s4, %s40
    %s42 = smul.u32 %s33, 8
    %s43 = scalar_lea.vmem [#allocation2], %s42
    %s44 = scalar_lea.sflag [#allocation3], %s42
    %p46 = scmp.lt.u32.totalorder 1, 8
    %p47 = pneg %p46
    // Predicated region
    $region17: #{feature_transformer_forward.1} parent=13 // pred_check
      _
    $region18: #{feature_transformer_forward.1} parent=13 // pred_check_branch
      %49 = sbr.rel (%p46) target = $region20
    $region19: #{feature_transformer_forward.1} parent=13 // pred_region
      %s64 = sand.u32 1, 7
      %p65 = scmp.eq.s32.totalorder %s64, 0
      %p66 = pneg %p65
      // Predicated region
      $region32: #{feature_transformer_forward.1} parent=19 // pred_check
        _
      $region33: #{feature_transformer_forward.1} parent=19 // pred_check_branch
        %68 = sbr.rel (%p65) target = $region35
      $region34: #{feature_transformer_forward.1} parent=19 // pred_region
        %s69 = sand.u32 1, 7
        %s70 = ssub.s32 1, %s69
        %s71 = scalar_lea.vmem %s41, %s70
        %s72 = ssub.s32 1, %s69
        %s73 = scalar_lea.vmem %s43, %s72 [#allocation2]
        %s74 = sshllo.u32 0, %s69
        loop: start=0, step=1, limit=1
        $region36: #{feature_transformer_forward.1} parent=34 // loop_pre_header
          _
        $region37: #{feature_transformer_forward.1} parent=34 // loop_header
          %s76 = sphi 0, %s80
          %p77 = scmp.ge.s32.totalorder %s76, 1
          %s81 = sphi %s71, %s71
          %s82 = sphi %s73, %s73
        $region38: #{feature_transformer_forward.1} parent=34 // loop_header_branch
          %79 = sbr.rel (%p77) target = $region42
        $region39: #{feature_transformer_forward.1} parent=34 // loop_body
          %v83 = vld [vmem:[%s81] sm:%s74]
          %84 = vst [vmem:[%s82] sm:%s74] %v83
        $region40: #{feature_transformer_forward.1} parent=34 // loop_footer
          %s80 = sadd.s32 1, %s76
        $region41: #{feature_transformer_forward.1} parent=34 // loop_footer_branch
          %75 = sbr.rel target = $region37
        $region42: #{feature_transformer_forward.1} parent=34 // loop_exit
          _
      $region35: #{feature_transformer_forward.1} parent=19 // pred_fallthru
        _
    $region20: #{feature_transformer_forward.1} parent=13 // pred_fallthru
      _
    // Predicated region
    $region21: #{feature_transformer_forward.1} parent=13 // pred_check
      %p50 = pneg %p46
    $region22: #{feature_transformer_forward.1} parent=13 // pred_check_branch
      %52 = sbr.rel (%p50) target = $region24
    $region23: #{feature_transformer_forward.1} parent=13 // pred_region
      %s53 = sshllo.u32 0, 1
      loop: start=0, step=1, limit=1
      $region25: #{feature_transformer_forward.1} parent=23 // loop_pre_header
        _
      $region26: #{feature_transformer_forward.1} parent=23 // loop_header
        %s55 = sphi 0, %s59
        %p56 = scmp.ge.s32.totalorder %s55, 1
        %s60 = sphi %s41, %s41
        %s61 = sphi %s43, %s43
      $region27: #{feature_transformer_forward.1} parent=23 // loop_header_branch
        %58 = sbr.rel (%p56) target = $region31
      $region28: #{feature_transformer_forward.1} parent=23 // loop_body
        %v62 = vld [vmem:[%s60] sm:%s53]
        %63 = vst [vmem:[%s61] sm:%s53] %v62
      $region29: #{feature_transformer_forward.1} parent=23 // loop_footer
        %s59 = sadd.s32 1, %s55
      $region30: #{feature_transformer_forward.1} parent=23 // loop_footer_branch
        %54 = sbr.rel target = $region26
      $region31: #{feature_transformer_forward.1} parent=23 // loop_exit
        _
    $region24: #{feature_transformer_forward.1} parent=13 // pred_fallthru
      _
    // Predicated region
    $region43: #{feature_transformer_forward.1} parent=13 // pred_check
      _
    $region44: #{feature_transformer_forward.1} parent=13 // pred_check_branch
      %87 = sbr.rel (0) target = $region46
    $region45: #{feature_transformer_forward.1} parent=13 // pred_region
      %88 = vsyncadd %s44, 16
    $region46: #{feature_transformer_forward.1} parent=13 // pred_fallthru
      _
    %s89 = sadd.s32 %s39, 8
    %s90 = sld [smem:[#allocation5 + %s89]]
    %s91 = scalar_lea.vmem %s4, %s90
    %s92 = sadd.s32 1, %s42
    %s93 = scalar_lea.vmem [#allocation2], %s92
    %s94 = scalar_lea.sflag [#allocation3], %s92
    %p96 = scmp.lt.u32.totalorder 1, 8
    %p97 = pneg %p96
    // Predicated region
    $region47: #{feature_transformer_forward.1} parent=13 // pred_check
      _
    $region48: #{feature_transformer_forward.1} parent=13 // pred_check_branch
      %99 = sbr.rel (%p96) target = $region50
    $region49: #{feature_transformer_forward.1} parent=13 // pred_region
      %s114 = sand.u32 1, 7
      %p115 = scmp.eq.s32.totalorder %s114, 0
      %p116 = pneg %p115
      // Predicated region
      $region62: #{feature_transformer_forward.1} parent=49 // pred_check
        _
      $region63: #{feature_transformer_forward.1} parent=49 // pred_check_branch
        %118 = sbr.rel (%p115) target = $region65
      $region64: #{feature_transformer_forward.1} parent=49 // pred_region
        %s119 = sand.u32 1, 7
        %s120 = ssub.s32 1, %s119
        %s121 = scalar_lea.vmem %s91, %s120
        %s122 = ssub.s32 1, %s119
        %s123 = scalar_lea.vmem %s93, %s122 [#allocation2]
        %s124 = sshllo.u32 0, %s119
        loop: start=0, step=1, limit=1
        $region66: #{feature_transformer_forward.1} parent=64 // loop_pre_header
          _
        $region67: #{feature_transformer_forward.1} parent=64 // loop_header
          %s126 = sphi 0, %s130
          %p127 = scmp.ge.s32.totalorder %s126, 1
          %s131 = sphi %s121, %s121
          %s132 = sphi %s123, %s123
        $region68: #{feature_transformer_forward.1} parent=64 // loop_header_branch
          %129 = sbr.rel (%p127) target = $region72
        $region69: #{feature_transformer_forward.1} parent=64 // loop_body
          %v133 = vld [vmem:[%s131] sm:%s124]
          %134 = vst [vmem:[%s132] sm:%s124] %v133
        $region70: #{feature_transformer_forward.1} parent=64 // loop_footer
          %s130 = sadd.s32 1, %s126
        $region71: #{feature_transformer_forward.1} parent=64 // loop_footer_branch
          %125 = sbr.rel target = $region67
        $region72: #{feature_transformer_forward.1} parent=64 // loop_exit
          _
      $region65: #{feature_transformer_forward.1} parent=49 // pred_fallthru
        _
    $region50: #{feature_transformer_forward.1} parent=13 // pred_fallthru
      _
    // Predicated region
    $region51: #{feature_transformer_forward.1} parent=13 // pred_check
      %p100 = pneg %p96
    $region52: #{feature_transformer_forward.1} parent=13 // pred_check_branch
      %102 = sbr.rel (%p100) target = $region54
    $region53: #{feature_transformer_forward.1} parent=13 // pred_region
      %s103 = sshllo.u32 0, 1
      loop: start=0, step=1, limit=1
      $region55: #{feature_transformer_forward.1} parent=53 // loop_pre_header
        _
      $region56: #{feature_transformer_forward.1} parent=53 // loop_header
        %s105 = sphi 0, %s109
        %p106 = scmp.ge.s32.totalorder %s105, 1
        %s110 = sphi %s91, %s91
        %s111 = sphi %s93, %s93
      $region57: #{feature_transformer_forward.1} parent=53 // loop_header_branch
        %108 = sbr.rel (%p106) target = $region61
      $region58: #{feature_transformer_forward.1} parent=53 // loop_body
        %v112 = vld [vmem:[%s110] sm:%s103]
        %113 = vst [vmem:[%s111] sm:%s103] %v112
      $region59: #{feature_transformer_forward.1} parent=53 // loop_footer
        %s109 = sadd.s32 1, %s105
      $region60: #{feature_transformer_forward.1} parent=53 // loop_footer_branch
        %104 = sbr.rel target = $region56
      $region61: #{feature_transformer_forward.1} parent=53 // loop_exit
        _
    $region54: #{feature_transformer_forward.1} parent=13 // pred_fallthru
      _
    // Predicated region
    $region73: #{feature_transformer_forward.1} parent=13 // pred_check
      _
    $region74: #{feature_transformer_forward.1} parent=13 // pred_check_branch
      %137 = sbr.rel (0) target = $region76
    $region75: #{feature_transformer_forward.1} parent=13 // pred_region
      %138 = vsyncadd %s94, 16
    $region76: #{feature_transformer_forward.1} parent=13 // pred_fallthru
      _
    %s139 = sadd.s32 %s39, 16
    %s140 = sld [smem:[#allocation5 + %s139]]
    %s141 = scalar_lea.vmem %s4, %s140
    %s142 = sadd.s32 2, %s42
    %s143 = scalar_lea.vmem [#allocation2], %s142
    %s144 = scalar_lea.sflag [#allocation3], %s142
    %p146 = scmp.lt.u32.totalorder 1, 8
    %p147 = pneg %p146
    // Predicated region
    $region77: #{feature_transformer_forward.1} parent=13 // pred_check
      _
    $region78: #{feature_transformer_forward.1} parent=13 // pred_check_branch
      %149 = sbr.rel (%p146) target = $region80
    $region79: #{feature_transformer_forward.1} parent=13 // pred_region
      %s164 = sand.u32 1, 7
      %p165 = scmp.eq.s32.totalorder %s164, 0
      %p166 = pneg %p165
      // Predicated region
      $region92: #{feature_transformer_forward.1} parent=79 // pred_check
        _
      $region93: #{feature_transformer_forward.1} parent=79 // pred_check_branch
        %168 = sbr.rel (%p165) target = $region95
      $region94: #{feature_transformer_forward.1} parent=79 // pred_region
        %s169 = sand.u32 1, 7
        %s170 = ssub.s32 1, %s169
        %s171 = scalar_lea.vmem %s141, %s170
        %s172 = ssub.s32 1, %s169
        %s173 = scalar_lea.vmem %s143, %s172 [#allocation2]
        %s174 = sshllo.u32 0, %s169
        loop: start=0, step=1, limit=1
        $region96: #{feature_transformer_forward.1} parent=94 // loop_pre_header
          _
        $region97: #{feature_transformer_forward.1} parent=94 // loop_header
          %s176 = sphi 0, %s180
          %p177 = scmp.ge.s32.totalorder %s176, 1
          %s181 = sphi %s171, %s171
          %s182 = sphi %s173, %s173
        $region98: #{feature_transformer_forward.1} parent=94 // loop_header_branch
          %179 = sbr.rel (%p177) target = $region102
        $region99: #{feature_transformer_forward.1} parent=94 // loop_body
          %v183 = vld [vmem:[%s181] sm:%s174]
          %184 = vst [vmem:[%s182] sm:%s174] %v183
        $region100: #{feature_transformer_forward.1} parent=94 // loop_footer
          %s180 = sadd.s32 1, %s176
        $region101: #{feature_transformer_forward.1} parent=94 // loop_footer_branch
          %175 = sbr.rel target = $region97
        $region102: #{feature_transformer_forward.1} parent=94 // loop_exit
          _
      $region95: #{feature_transformer_forward.1} parent=79 // pred_fallthru
        _
    $region80: #{feature_transformer_forward.1} parent=13 // pred_fallthru
      _
    // Predicated region
    $region81: #{feature_transformer_forward.1} parent=13 // pred_check
      %p150 = pneg %p146
    $region82: #{feature_transformer_forward.1} parent=13 // pred_check_branch
      %152 = sbr.rel (%p150) target = $region84
    $region83: #{feature_transformer_forward.1} parent=13 // pred_region
      %s153 = sshllo.u32 0, 1
      loop: start=0, step=1, limit=1
      $region85: #{feature_transformer_forward.1} parent=83 // loop_pre_header
        _
      $region86: #{feature_transformer_forward.1} parent=83 // loop_header
        %s155 = sphi 0, %s159
        %p156 = scmp.ge.s32.totalorder %s155, 1
        %s160 = sphi %s141, %s141
        %s161 = sphi %s143, %s143
      $region87: #{feature_transformer_forward.1} parent=83 // loop_header_branch
        %158 = sbr.rel (%p156) target = $region91
      $region88: #{feature_transformer_forward.1} parent=83 // loop_body
        %v162 = vld [vmem:[%s160] sm:%s153]
        %163 = vst [vmem:[%s161] sm:%s153] %v162
      $region89: #{feature_transformer_forward.1} parent=83 // loop_footer
        %s159 = sadd.s32 1, %s155
      $region90: #{feature_transformer_forward.1} parent=83 // loop_footer_branch
        %154 = sbr.rel target = $region86
      $region91: #{feature_transformer_forward.1} parent=83 // loop_exit
        _
    $region84: #{feature_transformer_forward.1} parent=13 // pred_fallthru
      _
    // Predicated region
    $region103: #{feature_transformer_forward.1} parent=13 // pred_check
      _
    $region104: #{feature_transformer_forward.1} parent=13 // pred_check_branch
      %187 = sbr.rel (0) target = $region106
    $region105: #{feature_transformer_forward.1} parent=13 // pred_region
      %188 = vsyncadd %s144, 16
    $region106: #{feature_transformer_forward.1} parent=13 // pred_fallthru
      _
    %s189 = sadd.s32 %s39, 24
    %s190 = sld [smem:[#allocation5 + %s189]]
    %s191 = scalar_lea.vmem %s4, %s190
    %s192 = sadd.s32 3, %s42
    %s193 = scalar_lea.vmem [#allocation2], %s192
    %s194 = scalar_lea.sflag [#allocation3], %s192
    %p196 = scmp.lt.u32.totalorder 1, 8
    %p197 = pneg %p196
    // Predicated region
    $region107: #{feature_transformer_forward.1} parent=13 // pred_check
      _
    $region108: #{feature_transformer_forward.1} parent=13 // pred_check_branch
      %199 = sbr.rel (%p196) target = $region110
    $region109: #{feature_transformer_forward.1} parent=13 // pred_region
      %s214 = sand.u32 1, 7
      %p215 = scmp.eq.s32.totalorder %s214, 0
      %p216 = pneg %p215
      // Predicated region
      $region122: #{feature_transformer_forward.1} parent=109 // pred_check
        _
      $region123: #{feature_transformer_forward.1} parent=109 // pred_check_branch
        %218 = sbr.rel (%p215) target = $region125
      $region124: #{feature_transformer_forward.1} parent=109 // pred_region
        %s219 = sand.u32 1, 7
        %s220 = ssub.s32 1, %s219
        %s221 = scalar_lea.vmem %s191, %s220
        %s222 = ssub.s32 1, %s219
        %s223 = scalar_lea.vmem %s193, %s222 [#allocation2]
        %s224 = sshllo.u32 0, %s219
        loop: start=0, step=1, limit=1
        $region126: #{feature_transformer_forward.1} parent=124 // loop_pre_header
          _
        $region127: #{feature_transformer_forward.1} parent=124 // loop_header
          %s226 = sphi 0, %s230
          %p227 = scmp.ge.s32.totalorder %s226, 1
          %s231 = sphi %s221, %s221
          %s232 = sphi %s223, %s223
        $region128: #{feature_transformer_forward.1} parent=124 // loop_header_branch
          %229 = sbr.rel (%p227) target = $region132
        $region129: #{feature_transformer_forward.1} parent=124 // loop_body
          %v233 = vld [vmem:[%s231] sm:%s224]
          %234 = vst [vmem:[%s232] sm:%s224] %v233
        $region130: #{feature_transformer_forward.1} parent=124 // loop_footer
          %s230 = sadd.s32 1, %s226
        $region131: #{feature_transformer_forward.1} parent=124 // loop_footer_branch
          %225 = sbr.rel target = $region127
        $region132: #{feature_transformer_forward.1} parent=124 // loop_exit
          _
      $region125: #{feature_transformer_forward.1} parent=109 // pred_fallthru
        _
    $region110: #{feature_transformer_forward.1} parent=13 // pred_fallthru
      _
    // Predicated region
    $region111: #{feature_transformer_forward.1} parent=13 // pred_check
      %p200 = pneg %p196
    $region112: #{feature_transformer_forward.1} parent=13 // pred_check_branch
      %202 = sbr.rel (%p200) target = $region114
    $region113: #{feature_transformer_forward.1} parent=13 // pred_region
      %s203 = sshllo.u32 0, 1
      loop: start=0, step=1, limit=1
      $region115: #{feature_transformer_forward.1} parent=113 // loop_pre_header
        _
      $region116: #{feature_transformer_forward.1} parent=113 // loop_header
        %s205 = sphi 0, %s209
        %p206 = scmp.ge.s32.totalorder %s205, 1
        %s210 = sphi %s191, %s191
        %s211 = sphi %s193, %s193
      $region117: #{feature_transformer_forward.1} parent=113 // loop_header_branch
        %208 = sbr.rel (%p206) target = $region121
      $region118: #{feature_transformer_forward.1} parent=113 // loop_body
        %v212 = vld [vmem:[%s210] sm:%s203]
        %213 = vst [vmem:[%s211] sm:%s203] %v212
      $region119: #{feature_transformer_forward.1} parent=113 // loop_footer
        %s209 = sadd.s32 1, %s205
      $region120: #{feature_transformer_forward.1} parent=113 // loop_footer_branch
        %204 = sbr.rel target = $region116
      $region121: #{feature_transformer_forward.1} parent=113 // loop_exit
        _
    $region114: #{feature_transformer_forward.1} parent=13 // pred_fallthru
      _
    // Predicated region
    $region133: #{feature_transformer_forward.1} parent=13 // pred_check
      _
    $region134: #{feature_transformer_forward.1} parent=13 // pred_check_branch
      %237 = sbr.rel (0) target = $region136
    $region135: #{feature_transformer_forward.1} parent=13 // pred_region
      %238 = vsyncadd %s194, 16
    $region136: #{feature_transformer_forward.1} parent=13 // pred_fallthru
      _
    %s239 = sadd.s32 %s39, 32
    %s240 = sld [smem:[#allocation5 + %s239]]
    %s241 = scalar_lea.vmem %s4, %s240
    %s242 = sadd.s32 4, %s42
    %s243 = scalar_lea.vmem [#allocation2], %s242
    %s244 = scalar_lea.sflag [#allocation3], %s242
    %p246 = scmp.lt.u32.totalorder 1, 8
    %p247 = pneg %p246
    // Predicated region
    $region137: #{feature_transformer_forward.1} parent=13 // pred_check
      _
    $region138: #{feature_transformer_forward.1} parent=13 // pred_check_branch
      %249 = sbr.rel (%p246) target = $region140
    $region139: #{feature_transformer_forward.1} parent=13 // pred_region
      %s264 = sand.u32 1, 7
      %p265 = scmp.eq.s32.totalorder %s264, 0
      %p266 = pneg %p265
      // Predicated region
      $region152: #{feature_transformer_forward.1} parent=139 // pred_check
        _
      $region153: #{feature_transformer_forward.1} parent=139 // pred_check_branch
        %268 = sbr.rel (%p265) target = $region155
      $region154: #{feature_transformer_forward.1} parent=139 // pred_region
        %s269 = sand.u32 1, 7
        %s270 = ssub.s32 1, %s269
        %s271 = scalar_lea.vmem %s241, %s270
        %s272 = ssub.s32 1, %s269
        %s273 = scalar_lea.vmem %s243, %s272 [#allocation2]
        %s274 = sshllo.u32 0, %s269
        loop: start=0, step=1, limit=1
        $region156: #{feature_transformer_forward.1} parent=154 // loop_pre_header
          _
        $region157: #{feature_transformer_forward.1} parent=154 // loop_header
          %s276 = sphi 0, %s280
          %p277 = scmp.ge.s32.totalorder %s276, 1
          %s281 = sphi %s271, %s271
          %s282 = sphi %s273, %s273
        $region158: #{feature_transformer_forward.1} parent=154 // loop_header_branch
          %279 = sbr.rel (%p277) target = $region162
        $region159: #{feature_transformer_forward.1} parent=154 // loop_body
          %v283 = vld [vmem:[%s281] sm:%s274]
          %284 = vst [vmem:[%s282] sm:%s274] %v283
        $region160: #{feature_transformer_forward.1} parent=154 // loop_footer
          %s280 = sadd.s32 1, %s276
        $region161: #{feature_transformer_forward.1} parent=154 // loop_footer_branch
          %275 = sbr.rel target = $region157
        $region162: #{feature_transformer_forward.1} parent=154 // loop_exit
          _
      $region155: #{feature_transformer_forward.1} parent=139 // pred_fallthru
        _
    $region140: #{feature_transformer_forward.1} parent=13 // pred_fallthru
      _
    // Predicated region
    $region141: #{feature_transformer_forward.1} parent=13 // pred_check
      %p250 = pneg %p246
    $region142: #{feature_transformer_forward.1} parent=13 // pred_check_branch
      %252 = sbr.rel (%p250) target = $region144
    $region143: #{feature_transformer_forward.1} parent=13 // pred_region
      %s253 = sshllo.u32 0, 1
      loop: start=0, step=1, limit=1
      $region145: #{feature_transformer_forward.1} parent=143 // loop_pre_header
        _
      $region146: #{feature_transformer_forward.1} parent=143 // loop_header
        %s255 = sphi 0, %s259
        %p256 = scmp.ge.s32.totalorder %s255, 1
        %s260 = sphi %s241, %s241
        %s261 = sphi %s243, %s243
      $region147: #{feature_transformer_forward.1} parent=143 // loop_header_branch
        %258 = sbr.rel (%p256) target = $region151
      $region148: #{feature_transformer_forward.1} parent=143 // loop_body
        %v262 = vld [vmem:[%s260] sm:%s253]
        %263 = vst [vmem:[%s261] sm:%s253] %v262
      $region149: #{feature_transformer_forward.1} parent=143 // loop_footer
        %s259 = sadd.s32 1, %s255
      $region150: #{feature_transformer_forward.1} parent=143 // loop_footer_branch
        %254 = sbr.rel target = $region146
      $region151: #{feature_transformer_forward.1} parent=143 // loop_exit
        _
    $region144: #{feature_transformer_forward.1} parent=13 // pred_fallthru
      _
    // Predicated region
    $region163: #{feature_transformer_forward.1} parent=13 // pred_check
      _
    $region164: #{feature_transformer_forward.1} parent=13 // pred_check_branch
      %287 = sbr.rel (0) target = $region166
    $region165: #{feature_transformer_forward.1} parent=13 // pred_region
      %288 = vsyncadd %s244, 16
    $region166: #{feature_transformer_forward.1} parent=13 // pred_fallthru
      _
    %s289 = sadd.s32 %s39, 40
    %s290 = sld [smem:[#allocation5 + %s289]]
    %s291 = scalar_lea.vmem %s4, %s290
    %s292 = sadd.s32 5, %s42
    %s293 = scalar_lea.vmem [#allocation2], %s292
    %s294 = scalar_lea.sflag [#allocation3], %s292
    %p296 = scmp.lt.u32.totalorder 1, 8
    %p297 = pneg %p296
    // Predicated region
    $region167: #{feature_transformer_forward.1} parent=13 // pred_check
      _
    $region168: #{feature_transformer_forward.1} parent=13 // pred_check_branch
      %299 = sbr.rel (%p296) target = $region170
    $region169: #{feature_transformer_forward.1} parent=13 // pred_region
      %s314 = sand.u32 1, 7
      %p315 = scmp.eq.s32.totalorder %s314, 0
      %p316 = pneg %p315
      // Predicated region
      $region182: #{feature_transformer_forward.1} parent=169 // pred_check
        _
      $region183: #{feature_transformer_forward.1} parent=169 // pred_check_branch
        %318 = sbr.rel (%p315) target = $region185
      $region184: #{feature_transformer_forward.1} parent=169 // pred_region
        %s319 = sand.u32 1, 7
        %s320 = ssub.s32 1, %s319
        %s321 = scalar_lea.vmem %s291, %s320
        %s322 = ssub.s32 1, %s319
        %s323 = scalar_lea.vmem %s293, %s322 [#allocation2]
        %s324 = sshllo.u32 0, %s319
        loop: start=0, step=1, limit=1
        $region186: #{feature_transformer_forward.1} parent=184 // loop_pre_header
          _
        $region187: #{feature_transformer_forward.1} parent=184 // loop_header
          %s326 = sphi 0, %s330
          %p327 = scmp.ge.s32.totalorder %s326, 1
          %s331 = sphi %s321, %s321
          %s332 = sphi %s323, %s323
        $region188: #{feature_transformer_forward.1} parent=184 // loop_header_branch
          %329 = sbr.rel (%p327) target = $region192
        $region189: #{feature_transformer_forward.1} parent=184 // loop_body
          %v333 = vld [vmem:[%s331] sm:%s324]
          %334 = vst [vmem:[%s332] sm:%s324] %v333
        $region190: #{feature_transformer_forward.1} parent=184 // loop_footer
          %s330 = sadd.s32 1, %s326
        $region191: #{feature_transformer_forward.1} parent=184 // loop_footer_branch
          %325 = sbr.rel target = $region187
        $region192: #{feature_transformer_forward.1} parent=184 // loop_exit
          _
      $region185: #{feature_transformer_forward.1} parent=169 // pred_fallthru
        _
    $region170: #{feature_transformer_forward.1} parent=13 // pred_fallthru
      _
    // Predicated region
    $region171: #{feature_transformer_forward.1} parent=13 // pred_check
      %p300 = pneg %p296
    $region172: #{feature_transformer_forward.1} parent=13 // pred_check_branch
      %302 = sbr.rel (%p300) target = $region174
    $region173: #{feature_transformer_forward.1} parent=13 // pred_region
      %s303 = sshllo.u32 0, 1
      loop: start=0, step=1, limit=1
      $region175: #{feature_transformer_forward.1} parent=173 // loop_pre_header
        _
      $region176: #{feature_transformer_forward.1} parent=173 // loop_header
        %s305 = sphi 0, %s309
        %p306 = scmp.ge.s32.totalorder %s305, 1
        %s310 = sphi %s291, %s291
        %s311 = sphi %s293, %s293
      $region177: #{feature_transformer_forward.1} parent=173 // loop_header_branch
        %308 = sbr.rel (%p306) target = $region181
      $region178: #{feature_transformer_forward.1} parent=173 // loop_body
        %v312 = vld [vmem:[%s310] sm:%s303]
        %313 = vst [vmem:[%s311] sm:%s303] %v312
      $region179: #{feature_transformer_forward.1} parent=173 // loop_footer
        %s309 = sadd.s32 1, %s305
      $region180: #{feature_transformer_forward.1} parent=173 // loop_footer_branch
        %304 = sbr.rel target = $region176
      $region181: #{feature_transformer_forward.1} parent=173 // loop_exit
        _
    $region174: #{feature_transformer_forward.1} parent=13 // pred_fallthru
      _
    // Predicated region
    $region193: #{feature_transformer_forward.1} parent=13 // pred_check
      _
    $region194: #{feature_transformer_forward.1} parent=13 // pred_check_branch
      %337 = sbr.rel (0) target = $region196
    $region195: #{feature_transformer_forward.1} parent=13 // pred_region
      %338 = vsyncadd %s294, 16
    $region196: #{feature_transformer_forward.1} parent=13 // pred_fallthru
      _
    %s339 = sadd.s32 %s39, 48
    %s340 = sld [smem:[#allocation5 + %s339]]
    %s341 = scalar_lea.vmem %s4, %s340
    %s342 = sadd.s32 6, %s42
    %s343 = scalar_lea.vmem [#allocation2], %s342
    %s344 = scalar_lea.sflag [#allocation3], %s342
    %p346 = scmp.lt.u32.totalorder 1, 8
    %p347 = pneg %p346
    // Predicated region
    $region197: #{feature_transformer_forward.1} parent=13 // pred_check
      _
    $region198: #{feature_transformer_forward.1} parent=13 // pred_check_branch
      %349 = sbr.rel (%p346) target = $region200
    $region199: #{feature_transformer_forward.1} parent=13 // pred_region
      %s364 = sand.u32 1, 7
      %p365 = scmp.eq.s32.totalorder %s364, 0
      %p366 = pneg %p365
      // Predicated region
      $region212: #{feature_transformer_forward.1} parent=199 // pred_check
        _
      $region213: #{feature_transformer_forward.1} parent=199 // pred_check_branch
        %368 = sbr.rel (%p365) target = $region215
      $region214: #{feature_transformer_forward.1} parent=199 // pred_region
        %s369 = sand.u32 1, 7
        %s370 = ssub.s32 1, %s369
        %s371 = scalar_lea.vmem %s341, %s370
        %s372 = ssub.s32 1, %s369
        %s373 = scalar_lea.vmem %s343, %s372 [#allocation2]
        %s374 = sshllo.u32 0, %s369
        loop: start=0, step=1, limit=1
        $region216: #{feature_transformer_forward.1} parent=214 // loop_pre_header
          _
        $region217: #{feature_transformer_forward.1} parent=214 // loop_header
          %s376 = sphi 0, %s380
          %p377 = scmp.ge.s32.totalorder %s376, 1
          %s381 = sphi %s371, %s371
          %s382 = sphi %s373, %s373
        $region218: #{feature_transformer_forward.1} parent=214 // loop_header_branch
          %379 = sbr.rel (%p377) target = $region222
        $region219: #{feature_transformer_forward.1} parent=214 // loop_body
          %v383 = vld [vmem:[%s381] sm:%s374]
          %384 = vst [vmem:[%s382] sm:%s374] %v383
        $region220: #{feature_transformer_forward.1} parent=214 // loop_footer
          %s380 = sadd.s32 1, %s376
        $region221: #{feature_transformer_forward.1} parent=214 // loop_footer_branch
          %375 = sbr.rel target = $region217
        $region222: #{feature_transformer_forward.1} parent=214 // loop_exit
          _
      $region215: #{feature_transformer_forward.1} parent=199 // pred_fallthru
        _
    $region200: #{feature_transformer_forward.1} parent=13 // pred_fallthru
      _
    // Predicated region
    $region201: #{feature_transformer_forward.1} parent=13 // pred_check
      %p350 = pneg %p346
    $region202: #{feature_transformer_forward.1} parent=13 // pred_check_branch
      %352 = sbr.rel (%p350) target = $region204
    $region203: #{feature_transformer_forward.1} parent=13 // pred_region
      %s353 = sshllo.u32 0, 1
      loop: start=0, step=1, limit=1
      $region205: #{feature_transformer_forward.1} parent=203 // loop_pre_header
        _
      $region206: #{feature_transformer_forward.1} parent=203 // loop_header
        %s355 = sphi 0, %s359
        %p356 = scmp.ge.s32.totalorder %s355, 1
        %s360 = sphi %s341, %s341
        %s361 = sphi %s343, %s343
      $region207: #{feature_transformer_forward.1} parent=203 // loop_header_branch
        %358 = sbr.rel (%p356) target = $region211
      $region208: #{feature_transformer_forward.1} parent=203 // loop_body
        %v362 = vld [vmem:[%s360] sm:%s353]
        %363 = vst [vmem:[%s361] sm:%s353] %v362
      $region209: #{feature_transformer_forward.1} parent=203 // loop_footer
        %s359 = sadd.s32 1, %s355
      $region210: #{feature_transformer_forward.1} parent=203 // loop_footer_branch
        %354 = sbr.rel target = $region206
      $region211: #{feature_transformer_forward.1} parent=203 // loop_exit
        _
    $region204: #{feature_transformer_forward.1} parent=13 // pred_fallthru
      _
    // Predicated region
    $region223: #{feature_transformer_forward.1} parent=13 // pred_check
      _
    $region224: #{feature_transformer_forward.1} parent=13 // pred_check_branch
      %387 = sbr.rel (0) target = $region226
    $region225: #{feature_transformer_forward.1} parent=13 // pred_region
      %388 = vsyncadd %s344, 16
    $region226: #{feature_transformer_forward.1} parent=13 // pred_fallthru
      _
    %s389 = sadd.s32 %s39, 56
    %s390 = sld [smem:[#allocation5 + %s389]]
    %s391 = scalar_lea.vmem %s4, %s390
    %s392 = sadd.s32 7, %s42
    %s393 = scalar_lea.vmem [#allocation2], %s392
    %s394 = scalar_lea.sflag [#allocation3], %s392
    %p396 = scmp.lt.u32.totalorder 1, 8
    %p397 = pneg %p396
    // Predicated region
    $region227: #{feature_transformer_forward.1} parent=13 // pred_check
      _
    $region228: #{feature_transformer_forward.1} parent=13 // pred_check_branch
      %399 = sbr.rel (%p396) target = $region230
    $region229: #{feature_transformer_forward.1} parent=13 // pred_region
      %s414 = sand.u32 1, 7
      %p415 = scmp.eq.s32.totalorder %s414, 0
      %p416 = pneg %p415
      // Predicated region
      $region242: #{feature_transformer_forward.1} parent=229 // pred_check
        _
      $region243: #{feature_transformer_forward.1} parent=229 // pred_check_branch
        %418 = sbr.rel (%p415) target = $region245
      $region244: #{feature_transformer_forward.1} parent=229 // pred_region
        %s419 = sand.u32 1, 7
        %s420 = ssub.s32 1, %s419
        %s421 = scalar_lea.vmem %s391, %s420
        %s422 = ssub.s32 1, %s419
        %s423 = scalar_lea.vmem %s393, %s422 [#allocation2]
        %s424 = sshllo.u32 0, %s419
        loop: start=0, step=1, limit=1
        $region246: #{feature_transformer_forward.1} parent=244 // loop_pre_header
          _
        $region247: #{feature_transformer_forward.1} parent=244 // loop_header
          %s426 = sphi 0, %s430
          %p427 = scmp.ge.s32.totalorder %s426, 1
          %s431 = sphi %s421, %s421
          %s432 = sphi %s423, %s423
        $region248: #{feature_transformer_forward.1} parent=244 // loop_header_branch
          %429 = sbr.rel (%p427) target = $region252
        $region249: #{feature_transformer_forward.1} parent=244 // loop_body
          %v433 = vld [vmem:[%s431] sm:%s424]
          %434 = vst [vmem:[%s432] sm:%s424] %v433
        $region250: #{feature_transformer_forward.1} parent=244 // loop_footer
          %s430 = sadd.s32 1, %s426
        $region251: #{feature_transformer_forward.1} parent=244 // loop_footer_branch
          %425 = sbr.rel target = $region247
        $region252: #{feature_transformer_forward.1} parent=244 // loop_exit
          _
      $region245: #{feature_transformer_forward.1} parent=229 // pred_fallthru
        _
    $region230: #{feature_transformer_forward.1} parent=13 // pred_fallthru
      _
    // Predicated region
    $region231: #{feature_transformer_forward.1} parent=13 // pred_check
      %p400 = pneg %p396
    $region232: #{feature_transformer_forward.1} parent=13 // pred_check_branch
      %402 = sbr.rel (%p400) target = $region234
    $region233: #{feature_transformer_forward.1} parent=13 // pred_region
      %s403 = sshllo.u32 0, 1
      loop: start=0, step=1, limit=1
      $region235: #{feature_transformer_forward.1} parent=233 // loop_pre_header
        _
      $region236: #{feature_transformer_forward.1} parent=233 // loop_header
        %s405 = sphi 0, %s409
        %p406 = scmp.ge.s32.totalorder %s405, 1
        %s410 = sphi %s391, %s391
        %s411 = sphi %s393, %s393
      $region237: #{feature_transformer_forward.1} parent=233 // loop_header_branch
        %408 = sbr.rel (%p406) target = $region241
      $region238: #{feature_transformer_forward.1} parent=233 // loop_body
        %v412 = vld [vmem:[%s410] sm:%s403]
        %413 = vst [vmem:[%s411] sm:%s403] %v412
      $region239: #{feature_transformer_forward.1} parent=233 // loop_footer
        %s409 = sadd.s32 1, %s405
      $region240: #{feature_transformer_forward.1} parent=233 // loop_footer_branch
        %404 = sbr.rel target = $region236
      $region241: #{feature_transformer_forward.1} parent=233 // loop_exit
        _
    $region234: #{feature_transformer_forward.1} parent=13 // pred_fallthru
      _
    // Predicated region
    $region253: #{feature_transformer_forward.1} parent=13 // pred_check
      _
    $region254: #{feature_transformer_forward.1} parent=13 // pred_check_branch
      %437 = sbr.rel (0) target = $region256
    $region255: #{feature_transformer_forward.1} parent=13 // pred_region
      %438 = vsyncadd %s394, 16
    $region256: #{feature_transformer_forward.1} parent=13 // pred_fallthru
      _
  $region14: #{feature_transformer_forward.1} parent=0 // loop_footer
    %s35 = sadd.s32 %s33, 1
  $region15: #{feature_transformer_forward.1} parent=0 // loop_footer_branch
    %32 = sbr.rel target = $region11
  $region16: #{feature_transformer_forward.1} parent=0 // loop_exit
    _
  %v439 = vld [vmem:[%s2] sm:$0xff]
  // While loop
  $region257: #{feature_transformer_forward.1} parent=0 // loop_pre_header
    _
  $region258: #{feature_transformer_forward.1} parent=0 // loop_header
    %s441 = sphi 0, %s443
    %p442 = scmp.ge.s32.totalorder %s441, %s21
  $region259: #{feature_transformer_forward.1} parent=0 // loop_header_branch
    %445 = sbr.rel (%p442) target = $region263
  $region260: #{feature_transformer_forward.1} parent=0 // loop_body
    %p446 = scmp.lt.s32.totalorder %s441, 0
    %s447 = ssub.s32 0, %s441
    %s448 = scalar_select %p446, %s447, %s441
    %s449 = sand.u32 %s448, 3
    %s450 = ssub.s32 0, %s449
    %s451 = scalar_select %p446, %s450, %s449
    %p452 = scmp.ne.s32.totalorder %s451, 0
    %p453 = scmp.lt.s32.totalorder %s451, 0
    %p454 = pnand %p453, %p452
    %p455 = pneg %p454
    %s456 = sadd.s32 %s451, 4
    %s457 = scalar_select %p455, %s456, %s451
    %s458 = smul.u32 %s457, 8
    %s459 = scalar_lea.vmem [#allocation2], %s458
    %s460 = scalar_lea.sflag [#allocation3], %s458
    %s461 = smul.u32 1, 1
    %s462 = sshll.u32 %s461, 4
    %463 = dma.done %s460, %s462
    %s464 = sadd.s32 1, %s458
    %s465 = scalar_lea.vmem [#allocation2], %s464
    %s466 = scalar_lea.sflag [#allocation3], %s464
    %s467 = sshll.u32 %s461, 4
    %468 = dma.done %s466, %s467
    %s469 = sadd.s32 2, %s458
    %s470 = scalar_lea.vmem [#allocation2], %s469
    %s471 = scalar_lea.sflag [#allocation3], %s469
    %s472 = sshll.u32 %s461, 4
    %473 = dma.done %s471, %s472
    %s474 = sadd.s32 3, %s458
    %s475 = scalar_lea.vmem [#allocation2], %s474
    %s476 = scalar_lea.sflag [#allocation3], %s474
    %s477 = sshll.u32 %s461, 4
    %478 = dma.done %s476, %s477
    %s479 = sadd.s32 4, %s458
    %s480 = scalar_lea.vmem [#allocation2], %s479
    %s481 = scalar_lea.sflag [#allocation3], %s479
    %s482 = sshll.u32 %s461, 4
    %483 = dma.done %s481, %s482
    %s484 = sadd.s32 5, %s458
    %s485 = scalar_lea.vmem [#allocation2], %s484
    %s486 = scalar_lea.sflag [#allocation3], %s484
    %s487 = sshll.u32 %s461, 4
    %488 = dma.done %s486, %s487
    %s489 = sadd.s32 6, %s458
    %s490 = scalar_lea.vmem [#allocation2], %s489
    %s491 = scalar_lea.sflag [#allocation3], %s489
    %s492 = sshll.u32 %s461, 4
    %493 = dma.done %s491, %s492
    %s494 = sadd.s32 7, %s458
    %s495 = scalar_lea.vmem [#allocation2], %s494
    %s496 = scalar_lea.sflag [#allocation3], %s494
    %s497 = sshll.u32 %s461, 4
    %498 = dma.done %s496, %s497
    %v499 = vstv %s441
    %vm500 = vcmp.gt.s32.totalorder %v439, %v499
    %v501 = vsel %vm500, 1, 0
    %v502 = vcvt.s32.f32 %v501
    %v503 = vld [vmem:[%s5] sm:$0xff]
    %v504 = vld [vmem:[%s459] sm:$0xff]
    %506 = vset.pattern.permute.xlu0 0
    %507 = vperm.xlu0 %506, %v502
    %v508 = vpop.permute.xlu0 %507
    %v510 = vmul.f32 %v504, %v508
    %v511 = vadd.f32 %v503, %v510
    %512 = vst [vmem:[%s5] sm:$0xff] %v511
    %s513 = sadd.s32 %s441, 4
    %p514 = scmp.lt.s32.totalorder %s513, %s21
    // Predicated region
    $region264: #{feature_transformer_forward.1} parent=260 // pred_check
      %p515 = pneg %p514
    $region265: #{feature_transformer_forward.1} parent=260 // pred_check_branch
      %517 = sbr.rel (%p515) target = $region267
    $region266: #{feature_transformer_forward.1} parent=260 // pred_region
      %s518 = smul.u32 0, 64
      %s519 = sadd.s32 %s518, %s513
      %s520 = sld [smem:[#allocation5 + %s519]]
      %s521 = scalar_lea.vmem %s4, %s520
      %p523 = scmp.lt.u32.totalorder 1, 8
      %p524 = pneg %p523
      // Predicated region
      $region268: #{feature_transformer_forward.1} parent=266 // pred_check
        _
      $region269: #{feature_transformer_forward.1} parent=266 // pred_check_branch
        %526 = sbr.rel (%p523) target = $region271
      $region270: #{feature_transformer_forward.1} parent=266 // pred_region
        %s541 = sand.u32 1, 7
        %p542 = scmp.eq.s32.totalorder %s541, 0
        %p543 = pneg %p542
        // Predicated region
        $region283: #{feature_transformer_forward.1} parent=270 // pred_check
          _
        $region284: #{feature_transformer_forward.1} parent=270 // pred_check_branch
          %545 = sbr.rel (%p542) target = $region286
        $region285: #{feature_transformer_forward.1} parent=270 // pred_region
          %s546 = sand.u32 1, 7
          %s547 = ssub.s32 1, %s546
          %s548 = scalar_lea.vmem %s521, %s547
          %s549 = ssub.s32 1, %s546
          %s550 = scalar_lea.vmem %s459, %s549 [#allocation2]
          %s551 = sshllo.u32 0, %s546
          loop: start=0, step=1, limit=1
          $region287: #{feature_transformer_forward.1} parent=285 // loop_pre_header
            _
          $region288: #{feature_transformer_forward.1} parent=285 // loop_header
            %s553 = sphi 0, %s557
            %p554 = scmp.ge.s32.totalorder %s553, 1
            %s558 = sphi %s548, %s548
            %s559 = sphi %s550, %s550
          $region289: #{feature_transformer_forward.1} parent=285 // loop_header_branch
            %556 = sbr.rel (%p554) target = $region293
          $region290: #{feature_transformer_forward.1} parent=285 // loop_body
            %v560 = vld [vmem:[%s558] sm:%s551]
            %561 = vst [vmem:[%s559] sm:%s551] %v560
          $region291: #{feature_transformer_forward.1} parent=285 // loop_footer
            %s557 = sadd.s32 1, %s553
          $region292: #{feature_transformer_forward.1} parent=285 // loop_footer_branch
            %552 = sbr.rel target = $region288
          $region293: #{feature_transformer_forward.1} parent=285 // loop_exit
            _
        $region286: #{feature_transformer_forward.1} parent=270 // pred_fallthru
          _
      $region271: #{feature_transformer_forward.1} parent=266 // pred_fallthru
        _
      // Predicated region
      $region272: #{feature_transformer_forward.1} parent=266 // pred_check
        %p527 = pneg %p523
      $region273: #{feature_transformer_forward.1} parent=266 // pred_check_branch
        %529 = sbr.rel (%p527) target = $region275
      $region274: #{feature_transformer_forward.1} parent=266 // pred_region
        %s530 = sshllo.u32 0, 1
        loop: start=0, step=1, limit=1
        $region276: #{feature_transformer_forward.1} parent=274 // loop_pre_header
          _
        $region277: #{feature_transformer_forward.1} parent=274 // loop_header
          %s532 = sphi 0, %s536
          %p533 = scmp.ge.s32.totalorder %s532, 1
          %s537 = sphi %s521, %s521
          %s538 = sphi %s459, %s459
        $region278: #{feature_transformer_forward.1} parent=274 // loop_header_branch
          %535 = sbr.rel (%p533) target = $region282
        $region279: #{feature_transformer_forward.1} parent=274 // loop_body
          %v539 = vld [vmem:[%s537] sm:%s530]
          %540 = vst [vmem:[%s538] sm:%s530] %v539
        $region280: #{feature_transformer_forward.1} parent=274 // loop_footer
          %s536 = sadd.s32 1, %s532
        $region281: #{feature_transformer_forward.1} parent=274 // loop_footer_branch
          %531 = sbr.rel target = $region277
        $region282: #{feature_transformer_forward.1} parent=274 // loop_exit
          _
      $region275: #{feature_transformer_forward.1} parent=266 // pred_fallthru
        _
      // Predicated region
      $region294: #{feature_transformer_forward.1} parent=266 // pred_check
        _
      $region295: #{feature_transformer_forward.1} parent=266 // pred_check_branch
        %564 = sbr.rel (0) target = $region297
      $region296: #{feature_transformer_forward.1} parent=266 // pred_region
        %565 = vsyncadd %s460, 16
      $region297: #{feature_transformer_forward.1} parent=266 // pred_fallthru
        _
      %s566 = sadd.s32 %s519, 8
      %s567 = sld [smem:[#allocation5 + %s566]]
      %s568 = scalar_lea.vmem %s4, %s567
      %p570 = scmp.lt.u32.totalorder 1, 8
      %p571 = pneg %p570
      // Predicated region
      $region298: #{feature_transformer_forward.1} parent=266 // pred_check
        _
      $region299: #{feature_transformer_forward.1} parent=266 // pred_check_branch
        %573 = sbr.rel (%p570) target = $region301
      $region300: #{feature_transformer_forward.1} parent=266 // pred_region
        %s588 = sand.u32 1, 7
        %p589 = scmp.eq.s32.totalorder %s588, 0
        %p590 = pneg %p589
        // Predicated region
        $region313: #{feature_transformer_forward.1} parent=300 // pred_check
          _
        $region314: #{feature_transformer_forward.1} parent=300 // pred_check_branch
          %592 = sbr.rel (%p589) target = $region316
        $region315: #{feature_transformer_forward.1} parent=300 // pred_region
          %s593 = sand.u32 1, 7
          %s594 = ssub.s32 1, %s593
          %s595 = scalar_lea.vmem %s568, %s594
          %s596 = ssub.s32 1, %s593
          %s597 = scalar_lea.vmem %s465, %s596 [#allocation2]
          %s598 = sshllo.u32 0, %s593
          loop: start=0, step=1, limit=1
          $region317: #{feature_transformer_forward.1} parent=315 // loop_pre_header
            _
          $region318: #{feature_transformer_forward.1} parent=315 // loop_header
            %s600 = sphi 0, %s604
            %p601 = scmp.ge.s32.totalorder %s600, 1
            %s605 = sphi %s595, %s595
            %s606 = sphi %s597, %s597
          $region319: #{feature_transformer_forward.1} parent=315 // loop_header_branch
            %603 = sbr.rel (%p601) target = $region323
          $region320: #{feature_transformer_forward.1} parent=315 // loop_body
            %v607 = vld [vmem:[%s605] sm:%s598]
            %608 = vst [vmem:[%s606] sm:%s598] %v607
          $region321: #{feature_transformer_forward.1} parent=315 // loop_footer
            %s604 = sadd.s32 1, %s600
          $region322: #{feature_transformer_forward.1} parent=315 // loop_footer_branch
            %599 = sbr.rel target = $region318
          $region323: #{feature_transformer_forward.1} parent=315 // loop_exit
            _
        $region316: #{feature_transformer_forward.1} parent=300 // pred_fallthru
          _
      $region301: #{feature_transformer_forward.1} parent=266 // pred_fallthru
        _
      // Predicated region
      $region302: #{feature_transformer_forward.1} parent=266 // pred_check
        %p574 = pneg %p570
      $region303: #{feature_transformer_forward.1} parent=266 // pred_check_branch
        %576 = sbr.rel (%p574) target = $region305
      $region304: #{feature_transformer_forward.1} parent=266 // pred_region
        %s577 = sshllo.u32 0, 1
        loop: start=0, step=1, limit=1
        $region306: #{feature_transformer_forward.1} parent=304 // loop_pre_header
          _
        $region307: #{feature_transformer_forward.1} parent=304 // loop_header
          %s579 = sphi 0, %s583
          %p580 = scmp.ge.s32.totalorder %s579, 1
          %s584 = sphi %s568, %s568
          %s585 = sphi %s465, %s465
        $region308: #{feature_transformer_forward.1} parent=304 // loop_header_branch
          %582 = sbr.rel (%p580) target = $region312
        $region309: #{feature_transformer_forward.1} parent=304 // loop_body
          %v586 = vld [vmem:[%s584] sm:%s577]
          %587 = vst [vmem:[%s585] sm:%s577] %v586
        $region310: #{feature_transformer_forward.1} parent=304 // loop_footer
          %s583 = sadd.s32 1, %s579
        $region311: #{feature_transformer_forward.1} parent=304 // loop_footer_branch
          %578 = sbr.rel target = $region307
        $region312: #{feature_transformer_forward.1} parent=304 // loop_exit
          _
      $region305: #{feature_transformer_forward.1} parent=266 // pred_fallthru
        _
      // Predicated region
      $region324: #{feature_transformer_forward.1} parent=266 // pred_check
        _
      $region325: #{feature_transformer_forward.1} parent=266 // pred_check_branch
        %611 = sbr.rel (0) target = $region327
      $region326: #{feature_transformer_forward.1} parent=266 // pred_region
        %612 = vsyncadd %s466, 16
      $region327: #{feature_transformer_forward.1} parent=266 // pred_fallthru
        _
      %s613 = sadd.s32 %s519, 16
      %s614 = sld [smem:[#allocation5 + %s613]]
      %s615 = scalar_lea.vmem %s4, %s614
      %p617 = scmp.lt.u32.totalorder 1, 8
      %p618 = pneg %p617
      // Predicated region
      $region328: #{feature_transformer_forward.1} parent=266 // pred_check
        _
      $region329: #{feature_transformer_forward.1} parent=266 // pred_check_branch
        %620 = sbr.rel (%p617) target = $region331
      $region330: #{feature_transformer_forward.1} parent=266 // pred_region
        %s635 = sand.u32 1, 7
        %p636 = scmp.eq.s32.totalorder %s635, 0
        %p637 = pneg %p636
        // Predicated region
        $region343: #{feature_transformer_forward.1} parent=330 // pred_check
          _
        $region344: #{feature_transformer_forward.1} parent=330 // pred_check_branch
          %639 = sbr.rel (%p636) target = $region346
        $region345: #{feature_transformer_forward.1} parent=330 // pred_region
          %s640 = sand.u32 1, 7
          %s641 = ssub.s32 1, %s640
          %s642 = scalar_lea.vmem %s615, %s641
          %s643 = ssub.s32 1, %s640
          %s644 = scalar_lea.vmem %s470, %s643 [#allocation2]
          %s645 = sshllo.u32 0, %s640
          loop: start=0, step=1, limit=1
          $region347: #{feature_transformer_forward.1} parent=345 // loop_pre_header
            _
          $region348: #{feature_transformer_forward.1} parent=345 // loop_header
            %s647 = sphi 0, %s651
            %p648 = scmp.ge.s32.totalorder %s647, 1
            %s652 = sphi %s642, %s642
            %s653 = sphi %s644, %s644
          $region349: #{feature_transformer_forward.1} parent=345 // loop_header_branch
            %650 = sbr.rel (%p648) target = $region353
          $region350: #{feature_transformer_forward.1} parent=345 // loop_body
            %v654 = vld [vmem:[%s652] sm:%s645]
            %655 = vst [vmem:[%s653] sm:%s645] %v654
          $region351: #{feature_transformer_forward.1} parent=345 // loop_footer
            %s651 = sadd.s32 1, %s647
          $region352: #{feature_transformer_forward.1} parent=345 // loop_footer_branch
            %646 = sbr.rel target = $region348
          $region353: #{feature_transformer_forward.1} parent=345 // loop_exit
            _
        $region346: #{feature_transformer_forward.1} parent=330 // pred_fallthru
          _
      $region331: #{feature_transformer_forward.1} parent=266 // pred_fallthru
        _
      // Predicated region
      $region332: #{feature_transformer_forward.1} parent=266 // pred_check
        %p621 = pneg %p617
      $region333: #{feature_transformer_forward.1} parent=266 // pred_check_branch
        %623 = sbr.rel (%p621) target = $region335
      $region334: #{feature_transformer_forward.1} parent=266 // pred_region
        %s624 = sshllo.u32 0, 1
        loop: start=0, step=1, limit=1
        $region336: #{feature_transformer_forward.1} parent=334 // loop_pre_header
          _
        $region337: #{feature_transformer_forward.1} parent=334 // loop_header
          %s626 = sphi 0, %s630
          %p627 = scmp.ge.s32.totalorder %s626, 1
          %s631 = sphi %s615, %s615
          %s632 = sphi %s470, %s470
        $region338: #{feature_transformer_forward.1} parent=334 // loop_header_branch
          %629 = sbr.rel (%p627) target = $region342
        $region339: #{feature_transformer_forward.1} parent=334 // loop_body
          %v633 = vld [vmem:[%s631] sm:%s624]
          %634 = vst [vmem:[%s632] sm:%s624] %v633
        $region340: #{feature_transformer_forward.1} parent=334 // loop_footer
          %s630 = sadd.s32 1, %s626
        $region341: #{feature_transformer_forward.1} parent=334 // loop_footer_branch
          %625 = sbr.rel target = $region337
        $region342: #{feature_transformer_forward.1} parent=334 // loop_exit
          _
      $region335: #{feature_transformer_forward.1} parent=266 // pred_fallthru
        _
      // Predicated region
      $region354: #{feature_transformer_forward.1} parent=266 // pred_check
        _
      $region355: #{feature_transformer_forward.1} parent=266 // pred_check_branch
        %658 = sbr.rel (0) target = $region357
      $region356: #{feature_transformer_forward.1} parent=266 // pred_region
        %659 = vsyncadd %s471, 16
      $region357: #{feature_transformer_forward.1} parent=266 // pred_fallthru
        _
      %s660 = sadd.s32 %s519, 24
      %s661 = sld [smem:[#allocation5 + %s660]]
      %s662 = scalar_lea.vmem %s4, %s661
      %p664 = scmp.lt.u32.totalorder 1, 8
      %p665 = pneg %p664
      // Predicated region
      $region358: #{feature_transformer_forward.1} parent=266 // pred_check
        _
      $region359: #{feature_transformer_forward.1} parent=266 // pred_check_branch
        %667 = sbr.rel (%p664) target = $region361
      $region360: #{feature_transformer_forward.1} parent=266 // pred_region
        %s682 = sand.u32 1, 7
        %p683 = scmp.eq.s32.totalorder %s682, 0
        %p684 = pneg %p683
        // Predicated region
        $region373: #{feature_transformer_forward.1} parent=360 // pred_check
          _
        $region374: #{feature_transformer_forward.1} parent=360 // pred_check_branch
          %686 = sbr.rel (%p683) target = $region376
        $region375: #{feature_transformer_forward.1} parent=360 // pred_region
          %s687 = sand.u32 1, 7
          %s688 = ssub.s32 1, %s687
          %s689 = scalar_lea.vmem %s662, %s688
          %s690 = ssub.s32 1, %s687
          %s691 = scalar_lea.vmem %s475, %s690 [#allocation2]
          %s692 = sshllo.u32 0, %s687
          loop: start=0, step=1, limit=1
          $region377: #{feature_transformer_forward.1} parent=375 // loop_pre_header
            _
          $region378: #{feature_transformer_forward.1} parent=375 // loop_header
            %s694 = sphi 0, %s698
            %p695 = scmp.ge.s32.totalorder %s694, 1
            %s699 = sphi %s689, %s689
            %s700 = sphi %s691, %s691
          $region379: #{feature_transformer_forward.1} parent=375 // loop_header_branch
            %697 = sbr.rel (%p695) target = $region383
          $region380: #{feature_transformer_forward.1} parent=375 // loop_body
            %v701 = vld [vmem:[%s699] sm:%s692]
            %702 = vst [vmem:[%s700] sm:%s692] %v701
          $region381: #{feature_transformer_forward.1} parent=375 // loop_footer
            %s698 = sadd.s32 1, %s694
          $region382: #{feature_transformer_forward.1} parent=375 // loop_footer_branch
            %693 = sbr.rel target = $region378
          $region383: #{feature_transformer_forward.1} parent=375 // loop_exit
            _
        $region376: #{feature_transformer_forward.1} parent=360 // pred_fallthru
          _
      $region361: #{feature_transformer_forward.1} parent=266 // pred_fallthru
        _
      // Predicated region
      $region362: #{feature_transformer_forward.1} parent=266 // pred_check
        %p668 = pneg %p664
      $region363: #{feature_transformer_forward.1} parent=266 // pred_check_branch
        %670 = sbr.rel (%p668) target = $region365
      $region364: #{feature_transformer_forward.1} parent=266 // pred_region
        %s671 = sshllo.u32 0, 1
        loop: start=0, step=1, limit=1
        $region366: #{feature_transformer_forward.1} parent=364 // loop_pre_header
          _
        $region367: #{feature_transformer_forward.1} parent=364 // loop_header
          %s673 = sphi 0, %s677
          %p674 = scmp.ge.s32.totalorder %s673, 1
          %s678 = sphi %s662, %s662
          %s679 = sphi %s475, %s475
        $region368: #{feature_transformer_forward.1} parent=364 // loop_header_branch
          %676 = sbr.rel (%p674) target = $region372
        $region369: #{feature_transformer_forward.1} parent=364 // loop_body
          %v680 = vld [vmem:[%s678] sm:%s671]
          %681 = vst [vmem:[%s679] sm:%s671] %v680
        $region370: #{feature_transformer_forward.1} parent=364 // loop_footer
          %s677 = sadd.s32 1, %s673
        $region371: #{feature_transformer_forward.1} parent=364 // loop_footer_branch
          %672 = sbr.rel target = $region367
        $region372: #{feature_transformer_forward.1} parent=364 // loop_exit
          _
      $region365: #{feature_transformer_forward.1} parent=266 // pred_fallthru
        _
      // Predicated region
      $region384: #{feature_transformer_forward.1} parent=266 // pred_check
        _
      $region385: #{feature_transformer_forward.1} parent=266 // pred_check_branch
        %705 = sbr.rel (0) target = $region387
      $region386: #{feature_transformer_forward.1} parent=266 // pred_region
        %706 = vsyncadd %s476, 16
      $region387: #{feature_transformer_forward.1} parent=266 // pred_fallthru
        _
      %s707 = sadd.s32 %s519, 32
      %s708 = sld [smem:[#allocation5 + %s707]]
      %s709 = scalar_lea.vmem %s4, %s708
      %p711 = scmp.lt.u32.totalorder 1, 8
      %p712 = pneg %p711
      // Predicated region
      $region388: #{feature_transformer_forward.1} parent=266 // pred_check
        _
      $region389: #{feature_transformer_forward.1} parent=266 // pred_check_branch
        %714 = sbr.rel (%p711) target = $region391
      $region390: #{feature_transformer_forward.1} parent=266 // pred_region
        %s729 = sand.u32 1, 7
        %p730 = scmp.eq.s32.totalorder %s729, 0
        %p731 = pneg %p730
        // Predicated region
        $region403: #{feature_transformer_forward.1} parent=390 // pred_check
          _
        $region404: #{feature_transformer_forward.1} parent=390 // pred_check_branch
          %733 = sbr.rel (%p730) target = $region406
        $region405: #{feature_transformer_forward.1} parent=390 // pred_region
          %s734 = sand.u32 1, 7
          %s735 = ssub.s32 1, %s734
          %s736 = scalar_lea.vmem %s709, %s735
          %s737 = ssub.s32 1, %s734
          %s738 = scalar_lea.vmem %s480, %s737 [#allocation2]
          %s739 = sshllo.u32 0, %s734
          loop: start=0, step=1, limit=1
          $region407: #{feature_transformer_forward.1} parent=405 // loop_pre_header
            _
          $region408: #{feature_transformer_forward.1} parent=405 // loop_header
            %s741 = sphi 0, %s745
            %p742 = scmp.ge.s32.totalorder %s741, 1
            %s746 = sphi %s736, %s736
            %s747 = sphi %s738, %s738
          $region409: #{feature_transformer_forward.1} parent=405 // loop_header_branch
            %744 = sbr.rel (%p742) target = $region413
          $region410: #{feature_transformer_forward.1} parent=405 // loop_body
            %v748 = vld [vmem:[%s746] sm:%s739]
            %749 = vst [vmem:[%s747] sm:%s739] %v748
          $region411: #{feature_transformer_forward.1} parent=405 // loop_footer
            %s745 = sadd.s32 1, %s741
          $region412: #{feature_transformer_forward.1} parent=405 // loop_footer_branch
            %740 = sbr.rel target = $region408
          $region413: #{feature_transformer_forward.1} parent=405 // loop_exit
            _
        $region406: #{feature_transformer_forward.1} parent=390 // pred_fallthru
          _
      $region391: #{feature_transformer_forward.1} parent=266 // pred_fallthru
        _
      // Predicated region
      $region392: #{feature_transformer_forward.1} parent=266 // pred_check
        %p715 = pneg %p711
      $region393: #{feature_transformer_forward.1} parent=266 // pred_check_branch
        %717 = sbr.rel (%p715) target = $region395
      $region394: #{feature_transformer_forward.1} parent=266 // pred_region
        %s718 = sshllo.u32 0, 1
        loop: start=0, step=1, limit=1
        $region396: #{feature_transformer_forward.1} parent=394 // loop_pre_header
          _
        $region397: #{feature_transformer_forward.1} parent=394 // loop_header
          %s720 = sphi 0, %s724
          %p721 = scmp.ge.s32.totalorder %s720, 1
          %s725 = sphi %s709, %s709
          %s726 = sphi %s480, %s480
        $region398: #{feature_transformer_forward.1} parent=394 // loop_header_branch
          %723 = sbr.rel (%p721) target = $region402
        $region399: #{feature_transformer_forward.1} parent=394 // loop_body
          %v727 = vld [vmem:[%s725] sm:%s718]
          %728 = vst [vmem:[%s726] sm:%s718] %v727
        $region400: #{feature_transformer_forward.1} parent=394 // loop_footer
          %s724 = sadd.s32 1, %s720
        $region401: #{feature_transformer_forward.1} parent=394 // loop_footer_branch
          %719 = sbr.rel target = $region397
        $region402: #{feature_transformer_forward.1} parent=394 // loop_exit
          _
      $region395: #{feature_transformer_forward.1} parent=266 // pred_fallthru
        _
      // Predicated region
      $region414: #{feature_transformer_forward.1} parent=266 // pred_check
        _
      $region415: #{feature_transformer_forward.1} parent=266 // pred_check_branch
        %752 = sbr.rel (0) target = $region417
      $region416: #{feature_transformer_forward.1} parent=266 // pred_region
        %753 = vsyncadd %s481, 16
      $region417: #{feature_transformer_forward.1} parent=266 // pred_fallthru
        _
      %s754 = sadd.s32 %s519, 40
      %s755 = sld [smem:[#allocation5 + %s754]]
      %s756 = scalar_lea.vmem %s4, %s755
      %p758 = scmp.lt.u32.totalorder 1, 8
      %p759 = pneg %p758
      // Predicated region
      $region418: #{feature_transformer_forward.1} parent=266 // pred_check
        _
      $region419: #{feature_transformer_forward.1} parent=266 // pred_check_branch
        %761 = sbr.rel (%p758) target = $region421
      $region420: #{feature_transformer_forward.1} parent=266 // pred_region
        %s776 = sand.u32 1, 7
        %p777 = scmp.eq.s32.totalorder %s776, 0
        %p778 = pneg %p777
        // Predicated region
        $region433: #{feature_transformer_forward.1} parent=420 // pred_check
          _
        $region434: #{feature_transformer_forward.1} parent=420 // pred_check_branch
          %780 = sbr.rel (%p777) target = $region436
        $region435: #{feature_transformer_forward.1} parent=420 // pred_region
          %s781 = sand.u32 1, 7
          %s782 = ssub.s32 1, %s781
          %s783 = scalar_lea.vmem %s756, %s782
          %s784 = ssub.s32 1, %s781
          %s785 = scalar_lea.vmem %s485, %s784 [#allocation2]
          %s786 = sshllo.u32 0, %s781
          loop: start=0, step=1, limit=1
          $region437: #{feature_transformer_forward.1} parent=435 // loop_pre_header
            _
          $region438: #{feature_transformer_forward.1} parent=435 // loop_header
            %s788 = sphi 0, %s792
            %p789 = scmp.ge.s32.totalorder %s788, 1
            %s793 = sphi %s783, %s783
            %s794 = sphi %s785, %s785
          $region439: #{feature_transformer_forward.1} parent=435 // loop_header_branch
            %791 = sbr.rel (%p789) target = $region443
          $region440: #{feature_transformer_forward.1} parent=435 // loop_body
            %v795 = vld [vmem:[%s793] sm:%s786]
            %796 = vst [vmem:[%s794] sm:%s786] %v795
          $region441: #{feature_transformer_forward.1} parent=435 // loop_footer
            %s792 = sadd.s32 1, %s788
          $region442: #{feature_transformer_forward.1} parent=435 // loop_footer_branch
            %787 = sbr.rel target = $region438
          $region443: #{feature_transformer_forward.1} parent=435 // loop_exit
            _
        $region436: #{feature_transformer_forward.1} parent=420 // pred_fallthru
          _
      $region421: #{feature_transformer_forward.1} parent=266 // pred_fallthru
        _
      // Predicated region
      $region422: #{feature_transformer_forward.1} parent=266 // pred_check
        %p762 = pneg %p758
      $region423: #{feature_transformer_forward.1} parent=266 // pred_check_branch
        %764 = sbr.rel (%p762) target = $region425
      $region424: #{feature_transformer_forward.1} parent=266 // pred_region
        %s765 = sshllo.u32 0, 1
        loop: start=0, step=1, limit=1
        $region426: #{feature_transformer_forward.1} parent=424 // loop_pre_header
          _
        $region427: #{feature_transformer_forward.1} parent=424 // loop_header
          %s767 = sphi 0, %s771
          %p768 = scmp.ge.s32.totalorder %s767, 1
          %s772 = sphi %s756, %s756
          %s773 = sphi %s485, %s485
        $region428: #{feature_transformer_forward.1} parent=424 // loop_header_branch
          %770 = sbr.rel (%p768) target = $region432
        $region429: #{feature_transformer_forward.1} parent=424 // loop_body
          %v774 = vld [vmem:[%s772] sm:%s765]
          %775 = vst [vmem:[%s773] sm:%s765] %v774
        $region430: #{feature_transformer_forward.1} parent=424 // loop_footer
          %s771 = sadd.s32 1, %s767
        $region431: #{feature_transformer_forward.1} parent=424 // loop_footer_branch
          %766 = sbr.rel target = $region427
        $region432: #{feature_transformer_forward.1} parent=424 // loop_exit
          _
      $region425: #{feature_transformer_forward.1} parent=266 // pred_fallthru
        _
      // Predicated region
      $region444: #{feature_transformer_forward.1} parent=266 // pred_check
        _
      $region445: #{feature_transformer_forward.1} parent=266 // pred_check_branch
        %799 = sbr.rel (0) target = $region447
      $region446: #{feature_transformer_forward.1} parent=266 // pred_region
        %800 = vsyncadd %s486, 16
      $region447: #{feature_transformer_forward.1} parent=266 // pred_fallthru
        _
      %s801 = sadd.s32 %s519, 48
      %s802 = sld [smem:[#allocation5 + %s801]]
      %s803 = scalar_lea.vmem %s4, %s802
      %p805 = scmp.lt.u32.totalorder 1, 8
      %p806 = pneg %p805
      // Predicated region
      $region448: #{feature_transformer_forward.1} parent=266 // pred_check
        _
      $region449: #{feature_transformer_forward.1} parent=266 // pred_check_branch
        %808 = sbr.rel (%p805) target = $region451
      $region450: #{feature_transformer_forward.1} parent=266 // pred_region
        %s823 = sand.u32 1, 7
        %p824 = scmp.eq.s32.totalorder %s823, 0
        %p825 = pneg %p824
        // Predicated region
        $region463: #{feature_transformer_forward.1} parent=450 // pred_check
          _
        $region464: #{feature_transformer_forward.1} parent=450 // pred_check_branch
          %827 = sbr.rel (%p824) target = $region466
        $region465: #{feature_transformer_forward.1} parent=450 // pred_region
          %s828 = sand.u32 1, 7
          %s829 = ssub.s32 1, %s828
          %s830 = scalar_lea.vmem %s803, %s829
          %s831 = ssub.s32 1, %s828
          %s832 = scalar_lea.vmem %s490, %s831 [#allocation2]
          %s833 = sshllo.u32 0, %s828
          loop: start=0, step=1, limit=1
          $region467: #{feature_transformer_forward.1} parent=465 // loop_pre_header
            _
          $region468: #{feature_transformer_forward.1} parent=465 // loop_header
            %s835 = sphi 0, %s839
            %p836 = scmp.ge.s32.totalorder %s835, 1
            %s840 = sphi %s830, %s830
            %s841 = sphi %s832, %s832
          $region469: #{feature_transformer_forward.1} parent=465 // loop_header_branch
            %838 = sbr.rel (%p836) target = $region473
          $region470: #{feature_transformer_forward.1} parent=465 // loop_body
            %v842 = vld [vmem:[%s840] sm:%s833]
            %843 = vst [vmem:[%s841] sm:%s833] %v842
          $region471: #{feature_transformer_forward.1} parent=465 // loop_footer
            %s839 = sadd.s32 1, %s835
          $region472: #{feature_transformer_forward.1} parent=465 // loop_footer_branch
            %834 = sbr.rel target = $region468
          $region473: #{feature_transformer_forward.1} parent=465 // loop_exit
            _
        $region466: #{feature_transformer_forward.1} parent=450 // pred_fallthru
          _
      $region451: #{feature_transformer_forward.1} parent=266 // pred_fallthru
        _
      // Predicated region
      $region452: #{feature_transformer_forward.1} parent=266 // pred_check
        %p809 = pneg %p805
      $region453: #{feature_transformer_forward.1} parent=266 // pred_check_branch
        %811 = sbr.rel (%p809) target = $region455
      $region454: #{feature_transformer_forward.1} parent=266 // pred_region
        %s812 = sshllo.u32 0, 1
        loop: start=0, step=1, limit=1
        $region456: #{feature_transformer_forward.1} parent=454 // loop_pre_header
          _
        $region457: #{feature_transformer_forward.1} parent=454 // loop_header
          %s814 = sphi 0, %s818
          %p815 = scmp.ge.s32.totalorder %s814, 1
          %s819 = sphi %s803, %s803
          %s820 = sphi %s490, %s490
        $region458: #{feature_transformer_forward.1} parent=454 // loop_header_branch
          %817 = sbr.rel (%p815) target = $region462
        $region459: #{feature_transformer_forward.1} parent=454 // loop_body
          %v821 = vld [vmem:[%s819] sm:%s812]
          %822 = vst [vmem:[%s820] sm:%s812] %v821
        $region460: #{feature_transformer_forward.1} parent=454 // loop_footer
          %s818 = sadd.s32 1, %s814
        $region461: #{feature_transformer_forward.1} parent=454 // loop_footer_branch
          %813 = sbr.rel target = $region457
        $region462: #{feature_transformer_forward.1} parent=454 // loop_exit
          _
      $region455: #{feature_transformer_forward.1} parent=266 // pred_fallthru
        _
      // Predicated region
      $region474: #{feature_transformer_forward.1} parent=266 // pred_check
        _
      $region475: #{feature_transformer_forward.1} parent=266 // pred_check_branch
        %846 = sbr.rel (0) target = $region477
      $region476: #{feature_transformer_forward.1} parent=266 // pred_region
        %847 = vsyncadd %s491, 16
      $region477: #{feature_transformer_forward.1} parent=266 // pred_fallthru
        _
      %s848 = sadd.s32 %s519, 56
      %s849 = sld [smem:[#allocation5 + %s848]]
      %s850 = scalar_lea.vmem %s4, %s849
      %p852 = scmp.lt.u32.totalorder 1, 8
      %p853 = pneg %p852
      // Predicated region
      $region478: #{feature_transformer_forward.1} parent=266 // pred_check
        _
      $region479: #{feature_transformer_forward.1} parent=266 // pred_check_branch
        %855 = sbr.rel (%p852) target = $region481
      $region480: #{feature_transformer_forward.1} parent=266 // pred_region
        %s870 = sand.u32 1, 7
        %p871 = scmp.eq.s32.totalorder %s870, 0
        %p872 = pneg %p871
        // Predicated region
        $region493: #{feature_transformer_forward.1} parent=480 // pred_check
          _
        $region494: #{feature_transformer_forward.1} parent=480 // pred_check_branch
          %874 = sbr.rel (%p871) target = $region496
        $region495: #{feature_transformer_forward.1} parent=480 // pred_region
          %s875 = sand.u32 1, 7
          %s876 = ssub.s32 1, %s875
          %s877 = scalar_lea.vmem %s850, %s876
          %s878 = ssub.s32 1, %s875
          %s879 = scalar_lea.vmem %s495, %s878 [#allocation2]
          %s880 = sshllo.u32 0, %s875
          loop: start=0, step=1, limit=1
          $region497: #{feature_transformer_forward.1} parent=495 // loop_pre_header
            _
          $region498: #{feature_transformer_forward.1} parent=495 // loop_header
            %s882 = sphi 0, %s886
            %p883 = scmp.ge.s32.totalorder %s882, 1
            %s887 = sphi %s877, %s877
            %s888 = sphi %s879, %s879
          $region499: #{feature_transformer_forward.1} parent=495 // loop_header_branch
            %885 = sbr.rel (%p883) target = $region503
          $region500: #{feature_transformer_forward.1} parent=495 // loop_body
            %v889 = vld [vmem:[%s887] sm:%s880]
            %890 = vst [vmem:[%s888] sm:%s880] %v889
          $region501: #{feature_transformer_forward.1} parent=495 // loop_footer
            %s886 = sadd.s32 1, %s882
          $region502: #{feature_transformer_forward.1} parent=495 // loop_footer_branch
            %881 = sbr.rel target = $region498
          $region503: #{feature_transformer_forward.1} parent=495 // loop_exit
            _
        $region496: #{feature_transformer_forward.1} parent=480 // pred_fallthru
          _
      $region481: #{feature_transformer_forward.1} parent=266 // pred_fallthru
        _
      // Predicated region
      $region482: #{feature_transformer_forward.1} parent=266 // pred_check
        %p856 = pneg %p852
      $region483: #{feature_transformer_forward.1} parent=266 // pred_check_branch
        %858 = sbr.rel (%p856) target = $region485
      $region484: #{feature_transformer_forward.1} parent=266 // pred_region
        %s859 = sshllo.u32 0, 1
        loop: start=0, step=1, limit=1
        $region486: #{feature_transformer_forward.1} parent=484 // loop_pre_header
          _
        $region487: #{feature_transformer_forward.1} parent=484 // loop_header
          %s861 = sphi 0, %s865
          %p862 = scmp.ge.s32.totalorder %s861, 1
          %s866 = sphi %s850, %s850
          %s867 = sphi %s495, %s495
        $region488: #{feature_transformer_forward.1} parent=484 // loop_header_branch
          %864 = sbr.rel (%p862) target = $region492
        $region489: #{feature_transformer_forward.1} parent=484 // loop_body
          %v868 = vld [vmem:[%s866] sm:%s859]
          %869 = vst [vmem:[%s867] sm:%s859] %v868
        $region490: #{feature_transformer_forward.1} parent=484 // loop_footer
          %s865 = sadd.s32 1, %s861
        $region491: #{feature_transformer_forward.1} parent=484 // loop_footer_branch
          %860 = sbr.rel target = $region487
        $region492: #{feature_transformer_forward.1} parent=484 // loop_exit
          _
      $region485: #{feature_transformer_forward.1} parent=266 // pred_fallthru
        _
      // Predicated region
      $region504: #{feature_transformer_forward.1} parent=266 // pred_check
        _
      $region505: #{feature_transformer_forward.1} parent=266 // pred_check_branch
        %893 = sbr.rel (0) target = $region507
      $region506: #{feature_transformer_forward.1} parent=266 // pred_region
        %894 = vsyncadd %s496, 16
      $region507: #{feature_transformer_forward.1} parent=266 // pred_fallthru
        _
    $region267: #{feature_transformer_forward.1} parent=260 // pred_fallthru
      _
  $region261: #{feature_transformer_forward.1} parent=0 // loop_footer
    %s443 = sadd.s32 %s441, 1
  $region262: #{feature_transformer_forward.1} parent=0 // loop_footer_branch
    %440 = sbr.rel target = $region258
  $region263: #{feature_transformer_forward.1} parent=0 // loop_exit
    _
  // Predicated region
  $region508: #{feature_transformer_forward.1} parent=0 // pred_check
    _
  $region509: #{feature_transformer_forward.1} parent=0 // pred_check_branch
    %896 = sbr.rel (0) target = $region511
  $region510: #{feature_transformer_forward.1} parent=0 // pred_region
    _
  $region511: #{feature_transformer_forward.1} parent=0 // pred_fallthru
    _
  // Predicated region
  $region512: #{feature_transformer_forward.1} parent=0 // pred_check
    _
  $region513: #{feature_transformer_forward.1} parent=0 // pred_check_branch
    %898 = sbr.rel (0) target = $region515
  $region514: #{feature_transformer_forward.1} parent=0 // pred_region
    _
  $region515: #{feature_transformer_forward.1} parent=0 // pred_fallthru
    _
  %899 = vsyncmov [#allocation3]
  %s900 = vpop.sfrf %899
  %p901 = scmp.eq.s32.totalorder %s900, 0
  %p902 = pneg %p901
  %904 = shalt.err (%p902)
  %s905 = scalar_lea.sflag [#allocation3], 1
  %906 = vsyncmov %s905
  %s907 = vpop.sfrf %906
  %p908 = scmp.eq.s32.totalorder %s907, 0
  %p909 = pneg %p908
  %911 = shalt.err (%p909)
  %s912 = scalar_lea.sflag [#allocation3], 2
  %913 = vsyncmov %s912
  %s914 = vpop.sfrf %913
  %p915 = scmp.eq.s32.totalorder %s914, 0
  %p916 = pneg %p915
  %918 = shalt.err (%p916)
  %s919 = scalar_lea.sflag [#allocation3], 3
  %920 = vsyncmov %s919
  %s921 = vpop.sfrf %920
  %p922 = scmp.eq.s32.totalorder %s921, 0
  %p923 = pneg %p922
  %925 = shalt.err (%p923)
  %s926 = scalar_lea.sflag [#allocation3], 4
  %927 = vsyncmov %s926
  %s928 = vpop.sfrf %927
  %p929 = scmp.eq.s32.totalorder %s928, 0
  %p930 = pneg %p929
  %932 = shalt.err (%p930)
  %s933 = scalar_lea.sflag [#allocation3], 5
  %934 = vsyncmov %s933
  %s935 = vpop.sfrf %934
  %p936 = scmp.eq.s32.totalorder %s935, 0
  %p937 = pneg %p936
  %939 = shalt.err (%p937)
  %s940 = scalar_lea.sflag [#allocation3], 6
  %941 = vsyncmov %s940
  %s942 = vpop.sfrf %941
  %p943 = scmp.eq.s32.totalorder %s942, 0
  %p944 = pneg %p943
  %946 = shalt.err (%p944)
  %s947 = scalar_lea.sflag [#allocation3], 7
  %948 = vsyncmov %s947
  %s949 = vpop.sfrf %948
  %p950 = scmp.eq.s32.totalorder %s949, 0
  %p951 = pneg %p950
  %953 = shalt.err (%p951)
  %s954 = scalar_lea.sflag [#allocation3], 8
  %955 = vsyncmov %s954
  %s956 = vpop.sfrf %955
  %p957 = scmp.eq.s32.totalorder %s956, 0
  %p958 = pneg %p957
  %960 = shalt.err (%p958)
  %s961 = scalar_lea.sflag [#allocation3], 9
  %962 = vsyncmov %s961
  %s963 = vpop.sfrf %962
  %p964 = scmp.eq.s32.totalorder %s963, 0
  %p965 = pneg %p964
  %967 = shalt.err (%p965)
  %s968 = scalar_lea.sflag [#allocation3], 10
  %969 = vsyncmov %s968
  %s970 = vpop.sfrf %969
  %p971 = scmp.eq.s32.totalorder %s970, 0
  %p972 = pneg %p971
  %974 = shalt.err (%p972)
  %s975 = scalar_lea.sflag [#allocation3], 11
  %976 = vsyncmov %s975
  %s977 = vpop.sfrf %976
  %p978 = scmp.eq.s32.totalorder %s977, 0
  %p979 = pneg %p978
  %981 = shalt.err (%p979)
  %s982 = scalar_lea.sflag [#allocation3], 12
  %983 = vsyncmov %s982
  %s984 = vpop.sfrf %983
  %p985 = scmp.eq.s32.totalorder %s984, 0
  %p986 = pneg %p985
  %988 = shalt.err (%p986)
  %s989 = scalar_lea.sflag [#allocation3], 13
  %990 = vsyncmov %s989
  %s991 = vpop.sfrf %990
  %p992 = scmp.eq.s32.totalorder %s991, 0
  %p993 = pneg %p992
  %995 = shalt.err (%p993)
  %s996 = scalar_lea.sflag [#allocation3], 14
  %997 = vsyncmov %s996
  %s998 = vpop.sfrf %997
  %p999 = scmp.eq.s32.totalorder %s998, 0
  %p1000 = pneg %p999
  %1002 = shalt.err (%p1000)
  %s1003 = scalar_lea.sflag [#allocation3], 15
  %1004 = vsyncmov %s1003
  %s1005 = vpop.sfrf %1004
  %p1006 = scmp.eq.s32.totalorder %s1005, 0
  %p1007 = pneg %p1006
  %1009 = shalt.err (%p1007)
  %s1010 = scalar_lea.sflag [#allocation3], 16
  %1011 = vsyncmov %s1010
  %s1012 = vpop.sfrf %1011
  %p1013 = scmp.eq.s32.totalorder %s1012, 0
  %p1014 = pneg %p1013
  %1016 = shalt.err (%p1014)
  %s1017 = scalar_lea.sflag [#allocation3], 17
  %1018 = vsyncmov %s1017
  %s1019 = vpop.sfrf %1018
  %p1020 = scmp.eq.s32.totalorder %s1019, 0
  %p1021 = pneg %p1020
  %1023 = shalt.err (%p1021)
  %s1024 = scalar_lea.sflag [#allocation3], 18
  %1025 = vsyncmov %s1024
  %s1026 = vpop.sfrf %1025
  %p1027 = scmp.eq.s32.totalorder %s1026, 0
  %p1028 = pneg %p1027
  %1030 = shalt.err (%p1028)
  %s1031 = scalar_lea.sflag [#allocation3], 19
  %1032 = vsyncmov %s1031
  %s1033 = vpop.sfrf %1032
  %p1034 = scmp.eq.s32.totalorder %s1033, 0
  %p1035 = pneg %p1034
  %1037 = shalt.err (%p1035)
  %s1038 = scalar_lea.sflag [#allocation3], 20
  %1039 = vsyncmov %s1038
  %s1040 = vpop.sfrf %1039
  %p1041 = scmp.eq.s32.totalorder %s1040, 0
  %p1042 = pneg %p1041
  %1044 = shalt.err (%p1042)
  %s1045 = scalar_lea.sflag [#allocation3], 21
  %1046 = vsyncmov %s1045
  %s1047 = vpop.sfrf %1046
  %p1048 = scmp.eq.s32.totalorder %s1047, 0
  %p1049 = pneg %p1048
  %1051 = shalt.err (%p1049)
  %s1052 = scalar_lea.sflag [#allocation3], 22
  %1053 = vsyncmov %s1052
  %s1054 = vpop.sfrf %1053
  %p1055 = scmp.eq.s32.totalorder %s1054, 0
  %p1056 = pneg %p1055
  %1058 = shalt.err (%p1056)
  %s1059 = scalar_lea.sflag [#allocation3], 23
  %1060 = vsyncmov %s1059
  %s1061 = vpop.sfrf %1060
  %p1062 = scmp.eq.s32.totalorder %s1061, 0
  %p1063 = pneg %p1062
  %1065 = shalt.err (%p1063)
  %s1066 = scalar_lea.sflag [#allocation3], 24
  %1067 = vsyncmov %s1066
  %s1068 = vpop.sfrf %1067
  %p1069 = scmp.eq.s32.totalorder %s1068, 0
  %p1070 = pneg %p1069
  %1072 = shalt.err (%p1070)
  %s1073 = scalar_lea.sflag [#allocation3], 25
  %1074 = vsyncmov %s1073
  %s1075 = vpop.sfrf %1074
  %p1076 = scmp.eq.s32.totalorder %s1075, 0
  %p1077 = pneg %p1076
  %1079 = shalt.err (%p1077)
  %s1080 = scalar_lea.sflag [#allocation3], 26
  %1081 = vsyncmov %s1080
  %s1082 = vpop.sfrf %1081
  %p1083 = scmp.eq.s32.totalorder %s1082, 0
  %p1084 = pneg %p1083
  %1086 = shalt.err (%p1084)
  %s1087 = scalar_lea.sflag [#allocation3], 27
  %1088 = vsyncmov %s1087
  %s1089 = vpop.sfrf %1088
  %p1090 = scmp.eq.s32.totalorder %s1089, 0
  %p1091 = pneg %p1090
  %1093 = shalt.err (%p1091)
  %s1094 = scalar_lea.sflag [#allocation3], 28
  %1095 = vsyncmov %s1094
  %s1096 = vpop.sfrf %1095
  %p1097 = scmp.eq.s32.totalorder %s1096, 0
  %p1098 = pneg %p1097
  %1100 = shalt.err (%p1098)
  %s1101 = scalar_lea.sflag [#allocation3], 29
  %1102 = vsyncmov %s1101
  %s1103 = vpop.sfrf %1102
  %p1104 = scmp.eq.s32.totalorder %s1103, 0
  %p1105 = pneg %p1104
  %1107 = shalt.err (%p1105)
  %s1108 = scalar_lea.sflag [#allocation3], 30
  %1109 = vsyncmov %s1108
  %s1110 = vpop.sfrf %1109
  %p1111 = scmp.eq.s32.totalorder %s1110, 0
  %p1112 = pneg %p1111
  %1114 = shalt.err (%p1112)
  %s1115 = scalar_lea.sflag [#allocation3], 31
  %1116 = vsyncmov %s1115
  %s1117 = vpop.sfrf %1116
  %p1118 = scmp.eq.s32.totalorder %s1117, 0
  %p1119 = pneg %p1118
  %1121 = shalt.err (%p1119)

</llo_original>
